<compile_context>
chip_gen: v6e
topology: v6e:2x2x1
jax: 0.10.0
libtpu: 0.0.40
codegen_flags: <defaults>
</compile_context>

<pallas_src>
import functools

import jax
import jax.numpy as jnp
from jax.experimental import pallas as pl
from jax.experimental.pallas import tpu as pltpu

EPS = 1e-5
F_IN = 768
F_PAD = 128                      # lane-padded hidden width
TM1_DEFAULT = 6144               # pass-1 batch tile (x tile is 768 lanes of f32)
TM23_DEFAULT = 8192              # pass-2/3 batch tile (h1 tile is 128 lanes of bf16)
VMEM_LIMIT = 48 * 1024 * 1024    # fits v7x's 64 MiB VMEM; ample headroom on v5e/v6e


def _cdiv(a, b):
    return -(-a // b)


def _round_up(a, m):
    return _cdiv(a, m) * m


def _pick_tile(requested, n):
    """Batch tile: multiple of 16 (bf16 sublane packing), never >> batch."""
    return _round_up(max(1, min(int(requested), int(n))), 16)


# --------------------------------------------------------------------------- #
# In-kernel helpers
# --------------------------------------------------------------------------- #
def _tile_stats(h, i, tm, n, s_ref, q_ref):
    """Write this tile's per-feature sum / sum-of-squares partials.

    Only the last tile can be ragged (grid = cdiv(n, tm)), so the row mask is
    gated behind pl.when and uses jnp.where: garbage (even NaN/Inf) in the
    padded rows of a partial edge block cannot leak into the statistics.
    """
    def write(hm):
        s = jnp.sum(hm, axis=0, keepdims=True)             # (1, F_PAD)
        q = jnp.sum(hm * hm, axis=0, keepdims=True)
        # stats block is (1, 8, F_PAD) so its last two dims are (8, 128)-tiled
        s_ref[0] = jnp.broadcast_to(s, (8, F_PAD))
        q_ref[0] = jnp.broadcast_to(q, (8, F_PAD))

    if n % tm == 0:                      # static: no ragged tile anywhere
        write(h)
        return

    last = pl.num_programs(0) - 1

    @pl.when(i != last)                  # full tiles: zero masking cost
    def _():
        write(h)

    @pl.when(i == last)                  # only the final tile is ragged
    def _():
        row = jax.lax.broadcasted_iota(jnp.int32, (tm, 1), 0) + i * tm
        write(jnp.where(row < n, h, 0.0))


# --------------------------------------------------------------------------- #
# Kernels
# --------------------------------------------------------------------------- #
def _fc1_kernel(x_ref, w1_ref, b1_ref, h1_ref, s_ref, q_ref, *, tm, n):
    """h1 = x @ W1 + b1 (x cast to bf16 in-kernel); bf16 h1 + bn1 stat partials."""
    i = pl.program_id(0)
    h = jnp.dot(x_ref[...].astype(jnp.bfloat16), w1_ref[...],
                preferred_element_type=jnp.float32) + b1_ref[...]
    h1_ref[...] = h.astype(jnp.bfloat16)          # bf16 intermediate (half bytes)
    _tile_stats(h, i, tm, n, s_ref, q_ref)        # stats from the f32 value


def _fc2_stats_kernel(h1_ref, k1_ref, c1_ref, w2_ref, b2_ref, s_ref, q_ref,
                      *, tm, n):
    """bn2 statistics of h2 = relu(h1*k1 + c1) @ W2 + b2 (h2 never stored)."""
    i = pl.program_id(0)
    a1 = jnp.maximum(h1_ref[...].astype(jnp.float32) * k1_ref[...] + c1_ref[...],
                     0.0)
    h2 = jnp.dot(a1.astype(jnp.bfloat16), w2_ref[...],
                 preferred_element_type=jnp.float32) + b2_ref[...]
    _tile_stats(h2, i, tm, n, s_ref, q_ref)


def _fc3_kernel(h1_ref, k1_ref, c1_ref, w2_ref, b2_ref,
                k2_ref, c2_ref, w3_ref, b3_ref, out_ref):
    """Recompute h2, apply bn2+relu, fc3; store only the 2 valid logits/row."""
    a1 = jnp.maximum(h1_ref[...].astype(jnp.float32) * k1_ref[...] + c1_ref[...],
                     0.0)
    h2 = jnp.dot(a1.astype(jnp.bfloat16), w2_ref[...],
                 preferred_element_type=jnp.float32) + b2_ref[...]
    a2 = jnp.maximum(h2 * k2_ref[...] + c2_ref[...], 0.0)
    o = jnp.dot(a2.astype(jnp.bfloat16), w3_ref[...],
                preferred_element_type=jnp.float32) + b3_ref[...]
    out_ref[...] = o[:, :2]                       # narrow (tm, 2) store


# --------------------------------------------------------------------------- #
# Wrapper
# --------------------------------------------------------------------------- #
def _bn_affine(s_part, q_part, gamma, beta, n):
    """Reduce per-tile partials -> BN affine k, c (each (1, F_PAD) f32)."""
    s = jnp.sum(s_part[:, :1, :], axis=0)         # (1, F_PAD)
    q = jnp.sum(q_part[:, :1, :], axis=0)
    mean = s * (1.0 / n)
    var = jnp.maximum(q * (1.0 / n) - mean * mean, 0.0)   # biased var, clamped
    inv = jax.lax.rsqrt(var + EPS)
    k = gamma * inv
    c = beta - mean * k
    return k, c


def basic_nn_road_segmentation(x, params, *, tm1=TM1_DEFAULT, tm23=TM23_DEFAULT):
    """Forward pass. x: any array whose trailing dims flatten to 768 per row."""
    kp = _prepare_kernel_params(params)

    x2d = jnp.reshape(x, (-1, F_IN)).astype(jnp.float32)  # no-op for f32 inputs
    n = x2d.shape[0]
    tm1 = _pick_tile(tm1, n)
    tm23 = _pick_tile(tm23, n)
    g1 = _cdiv(n, tm1)
    g23 = _cdiv(n, tm23)

    cparams = pltpu.CompilerParams(
        dimension_semantics=("parallel",), vmem_limit_bytes=VMEM_LIMIT)

    def row_tile(tm, cols):
        return pl.BlockSpec((tm, cols), lambda i: (i, 0))

    def const(rows, cols):
        return pl.BlockSpec((rows, cols), lambda i: (0, 0))

    stat_spec = pl.BlockSpec((1, 8, F_PAD), lambda i: (i, 0, 0))

    def stat_shape(g):
        return jax.ShapeDtypeStruct((g, 8, F_PAD), jnp.float32)

    # ---- pass 1: fc1 (bf16 h1) + bn1 partial statistics ---------------------
    h1, s1p, q1p = pl.pallas_call(
        functools.partial(_fc1_kernel, tm=tm1, n=n),
        grid=(g1,),
        in_specs=[row_tile(tm1, F_IN), const(F_IN, F_PAD), const(1, F_PAD)],
        out_specs=(row_tile(tm1, F_PAD), stat_spec, stat_spec),
        out_shape=(jax.ShapeDtypeStruct((n, F_PAD), jnp.bfloat16),
                   stat_shape(g1), stat_shape(g1)),
        compiler_params=cparams,
        cost_estimate=pl.CostEstimate(
            flops=2 * n * F_IN * F_PAD + 4 * n * F_PAD,
            transcendentals=0,
            bytes_accessed=n * F_IN * 4 + n * F_PAD * 2 + F_IN * F_PAD * 2
            + 2 * g1 * 8 * F_PAD * 4),
    )(x2d, kp["w1"], kp["b1"])

    k1, c1 = _bn_affine(s1p, q1p, kp["g1"], kp["be1"], n)

    # ---- pass 2: bn1+relu+fc2, emit only bn2 partial statistics -------------
    s2p, q2p = pl.pallas_call(
        functools.partial(_fc2_stats_kernel, tm=tm23, n=n),
        grid=(g23,),
        in_specs=[row_tile(tm23, F_PAD), const(1, F_PAD), const(1, F_PAD),
                  const(F_PAD, F_PAD), const(1, F_PAD)],
        out_specs=(stat_spec, stat_spec),
        out_shape=(stat_shape(g23), stat_shape(g23)),
        compiler_params=cparams,
        cost_estimate=pl.CostEstimate(
            flops=2 * n * F_PAD * F_PAD + 8 * n * F_PAD,
            transcendentals=0,
            bytes_accessed=n * F_PAD * 2 + F_PAD * F_PAD * 2
            + 2 * g23 * 8 * F_PAD * 4),
    )(h1, k1, c1, kp["w2"], kp["b2"])

    k2, c2 = _bn_affine(s2p, q2p, kp["g2"], kp["be2"], n)

    # ---- pass 3: recompute h2, bn2+relu+fc3, narrow (N, 2) output -----------
    out = pl.pallas_call(
        _fc3_kernel,
        grid=(g23,),
        in_specs=[row_tile(tm23, F_PAD),
                  const(1, F_PAD), const(1, F_PAD),
                  const(F_PAD, F_PAD), const(1, F_PAD),
                  const(1, F_PAD), const(1, F_PAD),
                  const(F_PAD, F_PAD), const(1, F_PAD)],
        out_specs=pl.BlockSpec((tm23, 2), lambda i: (i, 0)),
        out_shape=jax.ShapeDtypeStruct((n, 2), jnp.float32),
        compiler_params=cparams,
        cost_estimate=pl.CostEstimate(
            flops=4 * n * F_PAD * F_PAD + 12 * n * F_PAD,
            transcendentals=0,
            bytes_accessed=n * F_PAD * 2 + n * 2 * 4 + 2 * F_PAD * F_PAD * 2),
    )(h1, k1, c1, kp["w2"], kp["b2"], k2, c2, kp["w3"], kp["b3"])

    return out


# --------------------------------------------------------------------------- #
# Parameters
# --------------------------------------------------------------------------- #
def init_params(key):
    """Deterministic PyTorch-like init (uniform fan-in). Unpadded f32 params."""
    ks = jax.random.split(key, 6)

    def lin(kw, kb, fan_in, fan_out):
        bound = 1.0 / jnp.sqrt(jnp.float32(fan_in))
        w = jax.random.uniform(kw, (fan_in, fan_out), jnp.float32, -bound, bound)
        b = jax.random.uniform(kb, (fan_out,), jnp.float32, -bound, bound)
        return w, b

    w1, b1 = lin(ks[0], ks[1], 768, 100)
    w2, b2 = lin(ks[2], ks[3], 100, 100)
    w3, b3 = lin(ks[4], ks[5], 100, 2)
    ones = jnp.ones((100,), jnp.float32)
    zeros = jnp.zeros((100,), jnp.float32)
    return {"w1": w1, "b1": b1, "g1": ones, "be1": zeros,
            "w2": w2, "b2": b2, "g2": ones, "be2": zeros,
            "w3": w3, "b3": b3}


def _pad_row(v, width):
    return jnp.pad(v, ((0, width - v.shape[0]),)).reshape(1, width)


def _pad_mat(w, rows, cols):
    return jnp.pad(w, ((0, rows - w.shape[0]), (0, cols - w.shape[1])))


def _prepare_kernel_params(p):
    """Lane-pad everything to 128 and cast weights to bf16.

    Zero padding (weights, bias, gamma, beta) guarantees the padded lanes stay
    exactly zero through the whole network, so no garbage leaks into the
    (N, 2) logits produced by pass 3.
    """
    return {
        "w1": _pad_mat(p["w1"], F_IN, F_PAD).astype(jnp.bfloat16),
        "b1": _pad_row(p["b1"], F_PAD),
        "g1": _pad_row(p["g1"], F_PAD),
        "be1": _pad_row(p["be1"], F_PAD),
        "w2": _pad_mat(p["w2"], F_PAD, F_PAD).astype(jnp.bfloat16),
        "b2": _pad_row(p["b2"], F_PAD),
        "g2": _pad_row(p["g2"], F_PAD),
        "be2": _pad_row(p["be2"], F_PAD),
        "w3": _pad_mat(p["w3"], F_PAD, F_PAD).astype(jnp.bfloat16),
        "b3": _pad_row(p["b3"], F_PAD),
    }


# --------------------------------------------------------------------------- #
# Reference + self-test
# --------------------------------------------------------------------------- #
def _reference(x, p):
    """Pure-JAX f32 reference (training-mode BN, biased variance)."""
    h = jnp.reshape(x, (-1, F_IN))

    def bn_relu(h, g, b):
        m = jnp.mean(h, axis=0, keepdims=True)
        v = jnp.mean((h - m) ** 2, axis=0, keepdims=True)
        return jnp.maximum((h - m) / jnp.sqrt(v + EPS) * g + b, 0.0)

    h = bn_relu(h @ p["w1"] + p["b1"], p["g1"], p["be1"])
    h = bn_relu(h @ p["w2"] + p["b2"], p["g2"], p["be2"])
    return h @ p["w3"] + p["b3"]


if __name__ == "__main__":
    key = jax.random.PRNGKey(0)
    kx, kp, kx2 = jax.random.split(key, 3)

    params = init_params(kp)

    # Case 1: NCHW input, 16 samples of 3x16x16 = 768 features (single tile).
    x = jax.random.normal(kx, (16, 3, 16, 16), dtype=jnp.float32)
    fwd = jax.jit(basic_nn_road_segmentation)
    out = jax.block_until_ready(fwd(x, params))
    ref = _reference(x, params)
    assert out.shape == (16, 2), out.shape
    # bf16 matmuls + bf16 h1 intermediate vs f32 reference -> loose tolerance.
    assert jnp.allclose(out, ref, atol=5e-2, rtol=5e-2), (
        "mismatch vs reference: max abs err "
        f"{float(jnp.max(jnp.abs(out - ref)))}")

    # Case 2: ragged batch (40 rows) with small, *different* tiles per pass to
    # exercise multi-tile grids, partial edge blocks, the pl.when-gated row
    # mask and the cross-tile partial-statistics reduction.
    x2 = jax.random.normal(kx2, (40, 768), dtype=jnp.float32)
    fwd2 = jax.jit(functools.partial(basic_nn_road_segmentation,
                                     tm1=16, tm23=32))
    out2 = jax.block_until_ready(fwd2(x2, params))
    ref2 = _reference(x2, params)
    assert out2.shape == (40, 2), out2.shape
    assert jnp.allclose(out2, ref2, atol=5e-2, rtol=5e-2), (
        "mismatch vs reference (tiled/ragged): max abs err "
        f"{float(jnp.max(jnp.abs(out2 - ref2)))}")

    print("KERNEL_OK")
</pallas_src>

<mosaic_0001>
module attributes {stable_mosaic.version = 11 : i64} {
  func.func @_fc1_kernel(%arg0: i32, %arg1: memref<16x768xf32, #tpu.memory_space<vmem>>, %arg2: memref<768x128xbf16, #tpu.memory_space<vmem>>, %arg3: memref<1x128xf32, #tpu.memory_space<vmem>>, %arg4: memref<16x128xbf16, #tpu.memory_space<vmem>>, %arg5: memref<1x8x128xf32, #tpu.memory_space<vmem>>, %arg6: memref<1x8x128xf32, #tpu.memory_space<vmem>>) attributes {dimension_semantics = [#tpu.dimension_semantics<parallel>], iteration_bounds = array<i64: 1>, scalar_prefetch = 0 : i64, scratch_operands = 0 : i64, tpu.core_type = #tpu.core_type<tc>, window_params = [{transform_indices = @transform_0, window_bounds = array<i64: 16, 768>}, {pipeline_mode = #tpu.pipeline_mode<synchronous>, transform_indices = @transform_1, window_bounds = array<i64: 768, 128>}, {pipeline_mode = #tpu.pipeline_mode<synchronous>, transform_indices = @transform_2, window_bounds = array<i64: 1, 128>}, {transform_indices = @transform_3, window_bounds = array<i64: 16, 128>}, {transform_indices = @transform_4, window_bounds = array<i64: 1, 8, 128>}, {transform_indices = @transform_5, window_bounds = array<i64: 1, 8, 128>}]} {
    %c0 = arith.constant 0 : index
    %c0_0 = arith.constant 0 : index
    %0 = vector.load %arg1[%c0, %c0_0] : memref<16x768xf32, #tpu.memory_space<vmem>>, vector<16x768xf32>
    %1 = arith.truncf %0 : vector<16x768xf32> to vector<16x768xbf16>
    %c0_1 = arith.constant 0 : index
    %c0_2 = arith.constant 0 : index
    %2 = vector.load %arg2[%c0_1, %c0_2] : memref<768x128xbf16, #tpu.memory_space<vmem>>, vector<768x128xbf16>
    %cst = arith.constant dense<0.000000e+00> : vector<16x128xf32>
    %3 = tpu.matmul %1, %2, %cst {dimension_numbers = #tpu.dot_dimension_numbers<[1], [0], [0], [1], [0, 0, 1, 1], [], []>} : vector<16x768xbf16>, vector<768x128xbf16>, vector<16x128xf32> -> vector<16x128xf32>
    %c0_3 = arith.constant 0 : index
    %c0_4 = arith.constant 0 : index
    %4 = vector.load %arg3[%c0_3, %c0_4] : memref<1x128xf32, #tpu.memory_space<vmem>>, vector<1x128xf32>
    %5 = vector.broadcast %4 : vector<1x128xf32> to vector<16x128xf32>
    %6 = arith.addf %3, %5 : vector<16x128xf32>
    %7 = arith.truncf %6 : vector<16x128xf32> to vector<16x128xbf16>
    %c0_5 = arith.constant 0 : index
    %c0_6 = arith.constant 0 : index
    %8 = vector.load %arg4[%c0_5, %c0_6] : memref<16x128xbf16, #tpu.memory_space<vmem>>, vector<16x128xbf16>
    tpu.vector_store %arg4[%c0_5, %c0_6], %7 {strides = array<i32>} : memref<16x128xbf16, #tpu.memory_space<vmem>>, vector<16x128xbf16>,
    %cst_7 = arith.constant dense<0.000000e+00> : vector<128xf32>
    %9 = vector.multi_reduction <add>, %6, %cst_7 [0] : vector<16x128xf32> to vector<128xf32>
    %10 = vector.shape_cast %9 : vector<128xf32> to vector<1x128xf32>
    %11 = arith.mulf %6, %6 : vector<16x128xf32>
    %cst_8 = arith.constant dense<0.000000e+00> : vector<128xf32>
    %12 = vector.multi_reduction <add>, %11, %cst_8 [0] : vector<16x128xf32> to vector<128xf32>
    %13 = vector.shape_cast %12 : vector<128xf32> to vector<1x128xf32>
    %14 = vector.shape_cast %10 : vector<1x128xf32> to vector<1x128xf32>
    %15 = vector.broadcast %14 : vector<1x128xf32> to vector<8x128xf32>
    %c0_9 = arith.constant 0 : index
    %c0_10 = arith.constant 0 : index
    %c0_11 = arith.constant 0 : index
    %16 = vector.load %arg5[%c0_9, %c0_10, %c0_11] : memref<1x8x128xf32, #tpu.memory_space<vmem>>, vector<1x8x128xf32>
    %17 = vector.shape_cast %16 : vector<1x8x128xf32> to vector<8x128xf32>
    %18 = vector.shape_cast %15 : vector<8x128xf32> to vector<1x8x128xf32>
    tpu.vector_store %arg5[%c0_9, %c0_10, %c0_11], %18 {strides = array<i32>} : memref<1x8x128xf32, #tpu.memory_space<vmem>>, vector<1x8x128xf32>,
    %19 = vector.shape_cast %13 : vector<1x128xf32> to vector<1x128xf32>
    %20 = vector.broadcast %19 : vector<1x128xf32> to vector<8x128xf32>
    %c0_12 = arith.constant 0 : index
    %c0_13 = arith.constant 0 : index
    %c0_14 = arith.constant 0 : index
    %21 = vector.load %arg6[%c0_12, %c0_13, %c0_14] : memref<1x8x128xf32, #tpu.memory_space<vmem>>, vector<1x8x128xf32>
    %22 = vector.shape_cast %21 : vector<1x8x128xf32> to vector<8x128xf32>
    %23 = vector.shape_cast %20 : vector<8x128xf32> to vector<1x8x128xf32>
    tpu.vector_store %arg6[%c0_12, %c0_13, %c0_14], %23 {strides = array<i32>} : memref<1x8x128xf32, #tpu.memory_space<vmem>>, vector<1x8x128xf32>,
    return
  }
  func.func @transform_0(%arg0: i32) -> (i32, i32) {
    %c0_i32 = arith.constant 0 : i32
    %c0_i32_0 = arith.constant 0 : i32
    return %arg0, %c0_i32 : i32, i32
  }
  func.func @transform_1(%arg0: i32) -> (i32, i32) {
    %c0_i32 = arith.constant 0 : i32
    %c0_i32_0 = arith.constant 0 : i32
    %c0_i32_1 = arith.constant 0 : i32
    return %c0_i32, %c0_i32_0 : i32, i32
  }
  func.func @transform_2(%arg0: i32) -> (i32, i32) {
    %c0_i32 = arith.constant 0 : i32
    %c0_i32_0 = arith.constant 0 : i32
    %c0_i32_1 = arith.constant 0 : i32
    return %c0_i32, %c0_i32_0 : i32, i32
  }
  func.func @transform_3(%arg0: i32) -> (i32, i32) {
    %c0_i32 = arith.constant 0 : i32
    %c0_i32_0 = arith.constant 0 : i32
    return %arg0, %c0_i32 : i32, i32
  }
  func.func @transform_4(%arg0: i32) -> (i32, i32, i32) {
    %c0_i32 = arith.constant 0 : i32
    %c0_i32_0 = arith.constant 0 : i32
    %c0_i32_1 = arith.constant 0 : i32
    return %arg0, %c0_i32, %c0_i32_0 : i32, i32, i32
  }
  func.func @transform_5(%arg0: i32) -> (i32, i32, i32) {
    %c0_i32 = arith.constant 0 : i32
    %c0_i32_0 = arith.constant 0 : i32
    %c0_i32_1 = arith.constant 0 : i32
    return %arg0, %c0_i32, %c0_i32_0 : i32, i32, i32
  }
}

module attributes {stable_mosaic.version = 11 : i64} {
  func.func @_fc2_stats_kernel(%arg0: i32, %arg1: memref<16x128xbf16, #tpu.memory_space<vmem>>, %arg2: memref<1x128xf32, #tpu.memory_space<vmem>>, %arg3: memref<1x128xf32, #tpu.memory_space<vmem>>, %arg4: memref<128x128xbf16, #tpu.memory_space<vmem>>, %arg5: memref<1x128xf32, #tpu.memory_space<vmem>>, %arg6: memref<1x8x128xf32, #tpu.memory_space<vmem>>, %arg7: memref<1x8x128xf32, #tpu.memory_space<vmem>>) attributes {dimension_semantics = [#tpu.dimension_semantics<parallel>], iteration_bounds = array<i64: 1>, scalar_prefetch = 0 : i64, scratch_operands = 0 : i64, tpu.core_type = #tpu.core_type<tc>, window_params = [{transform_indices = @transform_0, window_bounds = array<i64: 16, 128>}, {pipeline_mode = #tpu.pipeline_mode<synchronous>, transform_indices = @transform_1, window_bounds = array<i64: 1, 128>}, {pipeline_mode = #tpu.pipeline_mode<synchronous>, transform_indices = @transform_2, window_bounds = array<i64: 1, 128>}, {pipeline_mode = #tpu.pipeline_mode<synchronous>, transform_indices = @transform_3, window_bounds = array<i64: 128, 128>}, {pipeline_mode = #tpu.pipeline_mode<synchronous>, transform_indices = @transform_4, window_bounds = array<i64: 1, 128>}, {transform_indices = @transform_5, window_bounds = array<i64: 1, 8, 128>}, {transform_indices = @transform_6, window_bounds = array<i64: 1, 8, 128>}]} {
    %c0 = arith.constant 0 : index
    %c0_0 = arith.constant 0 : index
    %0 = vector.load %arg1[%c0, %c0_0] : memref<16x128xbf16, #tpu.memory_space<vmem>>, vector<16x128xbf16>
    %1 = arith.extf %0 : vector<16x128xbf16> to vector<16x128xf32>
    %c0_1 = arith.constant 0 : index
    %c0_2 = arith.constant 0 : index
    %2 = vector.load %arg2[%c0_1, %c0_2] : memref<1x128xf32, #tpu.memory_space<vmem>>, vector<1x128xf32>
    %3 = vector.broadcast %2 : vector<1x128xf32> to vector<16x128xf32>
    %4 = arith.mulf %1, %3 : vector<16x128xf32>
    %c0_3 = arith.constant 0 : index
    %c0_4 = arith.constant 0 : index
    %5 = vector.load %arg3[%c0_3, %c0_4] : memref<1x128xf32, #tpu.memory_space<vmem>>, vector<1x128xf32>
    %6 = vector.broadcast %5 : vector<1x128xf32> to vector<16x128xf32>
    %7 = arith.addf %4, %6 : vector<16x128xf32>
    %cst = arith.constant 0.000000e+00 : f32
    %8 = vector.broadcast %cst : f32 to vector<16x128xf32>
    %9 = arith.maximumf %7, %8 : vector<16x128xf32>
    %10 = arith.truncf %9 : vector<16x128xf32> to vector<16x128xbf16>
    %c0_5 = arith.constant 0 : index
    %c0_6 = arith.constant 0 : index
    %11 = vector.load %arg4[%c0_5, %c0_6] : memref<128x128xbf16, #tpu.memory_space<vmem>>, vector<128x128xbf16>
    %cst_7 = arith.constant dense<0.000000e+00> : vector<16x128xf32>
    %12 = tpu.matmul %10, %11, %cst_7 {dimension_numbers = #tpu.dot_dimension_numbers<[1], [0], [0], [1], [0, 0, 1, 1], [], []>} : vector<16x128xbf16>, vector<128x128xbf16>, vector<16x128xf32> -> vector<16x128xf32>
    %c0_8 = arith.constant 0 : index
    %c0_9 = arith.constant 0 : index
    %13 = vector.load %arg5[%c0_8, %c0_9] : memref<1x128xf32, #tpu.memory_space<vmem>>, vector<1x128xf32>
    %14 = vector.broadcast %13 : vector<1x128xf32> to vector<16x128xf32>
    %15 = arith.addf %12, %14 : vector<16x128xf32>
    %cst_10 = arith.constant dense<0.000000e+00> : vector<128xf32>
    %16 = vector.multi_reduction <add>, %15, %cst_10 [0] : vector<16x128xf32> to vector<128xf32>
    %17 = vector.shape_cast %16 : vector<128xf32> to vector<1x128xf32>
    %18 = arith.mulf %15, %15 : vector<16x128xf32>
    %cst_11 = arith.constant dense<0.000000e+00> : vector<128xf32>
    %19 = vector.multi_reduction <add>, %18, %cst_11 [0] : vector<16x128xf32> to vector<128xf32>
    %20 = vector.shape_cast %19 : vector<128xf32> to vector<1x128xf32>
    %21 = vector.shape_cast %17 : vector<1x128xf32> to vector<1x128xf32>
    %22 = vector.broadcast %21 : vector<1x128xf32> to vector<8x128xf32>
    %c0_12 = arith.constant 0 : index
    %c0_13 = arith.constant 0 : index
    %c0_14 = arith.constant 0 : index
    %23 = vector.load %arg6[%c0_12, %c0_13, %c0_14] : memref<1x8x128xf32, #tpu.memory_space<vmem>>, vector<1x8x128xf32>
    %24 = vector.shape_cast %23 : vector<1x8x128xf32> to vector<8x128xf32>
    %25 = vector.shape_cast %22 : vector<8x128xf32> to vector<1x8x128xf32>
    tpu.vector_store %arg6[%c0_12, %c0_13, %c0_14], %25 {strides = array<i32>} : memref<1x8x128xf32, #tpu.memory_space<vmem>>, vector<1x8x128xf32>,
    %26 = vector.shape_cast %20 : vector<1x128xf32> to vector<1x128xf32>
    %27 = vector.broadcast %26 : vector<1x128xf32> to vector<8x128xf32>
    %c0_15 = arith.constant 0 : index
    %c0_16 = arith.constant 0 : index
    %c0_17 = arith.constant 0 : index
    %28 = vector.load %arg7[%c0_15, %c0_16, %c0_17] : memref<1x8x128xf32, #tpu.memory_space<vmem>>, vector<1x8x128xf32>
    %29 = vector.shape_cast %28 : vector<1x8x128xf32> to vector<8x128xf32>
    %30 = vector.shape_cast %27 : vector<8x128xf32> to vector<1x8x128xf32>
    tpu.vector_store %arg7[%c0_15, %c0_16, %c0_17], %30 {strides = array<i32>} : memref<1x8x128xf32, #tpu.memory_space<vmem>>, vector<1x8x128xf32>,
    return
  }
  func.func @transform_0(%arg0: i32) -> (i32, i32) {
    %c0_i32 = arith.constant 0 : i32
    %c0_i32_0 = arith.constant 0 : i32
    return %arg0, %c0_i32 : i32, i32
  }
  func.func @transform_1(%arg0: i32) -> (i32, i32) {
    %c0_i32 = arith.constant 0 : i32
    %c0_i32_0 = arith.constant 0 : i32
    %c0_i32_1 = arith.constant 0 : i32
    return %c0_i32, %c0_i32_0 : i32, i32
  }
  func.func @transform_2(%arg0: i32) -> (i32, i32) {
    %c0_i32 = arith.constant 0 : i32
    %c0_i32_0 = arith.constant 0 : i32
    %c0_i32_1 = arith.constant 0 : i32
    return %c0_i32, %c0_i32_0 : i32, i32
  }
  func.func @transform_3(%arg0: i32) -> (i32, i32) {
    %c0_i32 = arith.constant 0 : i32
    %c0_i32_0 = arith.constant 0 : i32
    %c0_i32_1 = arith.constant 0 : i32
    return %c0_i32, %c0_i32_0 : i32, i32
  }
  func.func @transform_4(%arg0: i32) -> (i32, i32) {
    %c0_i32 = arith.constant 0 : i32
    %c0_i32_0 = arith.constant 0 : i32
    %c0_i32_1 = arith.constant 0 : i32
    return %c0_i32, %c0_i32_0 : i32, i32
  }
  func.func @transform_5(%arg0: i32) -> (i32, i32, i32) {
    %c0_i32 = arith.constant 0 : i32
    %c0_i32_0 = arith.constant 0 : i32
    %c0_i32_1 = arith.constant 0 : i32
    return %arg0, %c0_i32, %c0_i32_0 : i32, i32, i32
  }
  func.func @transform_6(%arg0: i32) -> (i32, i32, i32) {
    %c0_i32 = arith.constant 0 : i32
    %c0_i32_0 = arith.constant 0 : i32
    %c0_i32_1 = arith.constant 0 : i32
    return %arg0, %c0_i32, %c0_i32_0 : i32, i32, i32
  }
}

module attributes {stable_mosaic.version = 11 : i64} {
  func.func @_fc3_kernel(%arg0: i32, %arg1: memref<16x128xbf16, #tpu.memory_space<vmem>>, %arg2: memref<1x128xf32, #tpu.memory_space<vmem>>, %arg3: memref<1x128xf32, #tpu.memory_space<vmem>>, %arg4: memref<128x128xbf16, #tpu.memory_space<vmem>>, %arg5: memref<1x128xf32, #tpu.memory_space<vmem>>, %arg6: memref<1x128xf32, #tpu.memory_space<vmem>>, %arg7: memref<1x128xf32, #tpu.memory_space<vmem>>, %arg8: memref<128x128xbf16, #tpu.memory_space<vmem>>, %arg9: memref<1x128xf32, #tpu.memory_space<vmem>>, %arg10: memref<16x2xf32, #tpu.memory_space<vmem>>) attributes {dimension_semantics = [#tpu.dimension_semantics<parallel>], iteration_bounds = array<i64: 1>, scalar_prefetch = 0 : i64, scratch_operands = 0 : i64, tpu.core_type = #tpu.core_type<tc>, window_params = [{transform_indices = @transform_0, window_bounds = array<i64: 16, 128>}, {pipeline_mode = #tpu.pipeline_mode<synchronous>, transform_indices = @transform_1, window_bounds = array<i64: 1, 128>}, {pipeline_mode = #tpu.pipeline_mode<synchronous>, transform_indices = @transform_2, window_bounds = array<i64: 1, 128>}, {pipeline_mode = #tpu.pipeline_mode<synchronous>, transform_indices = @transform_3, window_bounds = array<i64: 128, 128>}, {pipeline_mode = #tpu.pipeline_mode<synchronous>, transform_indices = @transform_4, window_bounds = array<i64: 1, 128>}, {pipeline_mode = #tpu.pipeline_mode<synchronous>, transform_indices = @transform_5, window_bounds = array<i64: 1, 128>}, {pipeline_mode = #tpu.pipeline_mode<synchronous>, transform_indices = @transform_6, window_bounds = array<i64: 1, 128>}, {pipeline_mode = #tpu.pipeline_mode<synchronous>, transform_indices = @transform_7, window_bounds = array<i64: 128, 128>}, {pipeline_mode = #tpu.pipeline_mode<synchronous>, transform_indices = @transform_8, window_bounds = array<i64: 1, 128>}, {transform_indices = @transform_9, window_bounds = array<i64: 16, 2>}]} {
    %c0 = arith.constant 0 : index
    %c0_0 = arith.constant 0 : index
    %0 = vector.load %arg1[%c0, %c0_0] : memref<16x128xbf16, #tpu.memory_space<vmem>>, vector<16x128xbf16>
    %1 = arith.extf %0 : vector<16x128xbf16> to vector<16x128xf32>
    %c0_1 = arith.constant 0 : index
    %c0_2 = arith.constant 0 : index
    %2 = vector.load %arg2[%c0_1, %c0_2] : memref<1x128xf32, #tpu.memory_space<vmem>>, vector<1x128xf32>
    %3 = vector.broadcast %2 : vector<1x128xf32> to vector<16x128xf32>
    %4 = arith.mulf %1, %3 : vector<16x128xf32>
    %c0_3 = arith.constant 0 : index
    %c0_4 = arith.constant 0 : index
    %5 = vector.load %arg3[%c0_3, %c0_4] : memref<1x128xf32, #tpu.memory_space<vmem>>, vector<1x128xf32>
    %6 = vector.broadcast %5 : vector<1x128xf32> to vector<16x128xf32>
    %7 = arith.addf %4, %6 : vector<16x128xf32>
    %cst = arith.constant 0.000000e+00 : f32
    %8 = vector.broadcast %cst : f32 to vector<16x128xf32>
    %9 = arith.maximumf %7, %8 : vector<16x128xf32>
    %10 = arith.truncf %9 : vector<16x128xf32> to vector<16x128xbf16>
    %c0_5 = arith.constant 0 : index
    %c0_6 = arith.constant 0 : index
    %11 = vector.load %arg4[%c0_5, %c0_6] : memref<128x128xbf16, #tpu.memory_space<vmem>>, vector<128x128xbf16>
    %cst_7 = arith.constant dense<0.000000e+00> : vector<16x128xf32>
    %12 = tpu.matmul %10, %11, %cst_7 {dimension_numbers = #tpu.dot_dimension_numbers<[1], [0], [0], [1], [0, 0, 1, 1], [], []>} : vector<16x128xbf16>, vector<128x128xbf16>, vector<16x128xf32> -> vector<16x128xf32>
    %c0_8 = arith.constant 0 : index
    %c0_9 = arith.constant 0 : index
    %13 = vector.load %arg5[%c0_8, %c0_9] : memref<1x128xf32, #tpu.memory_space<vmem>>, vector<1x128xf32>
    %14 = vector.broadcast %13 : vector<1x128xf32> to vector<16x128xf32>
    %15 = arith.addf %12, %14 : vector<16x128xf32>
    %c0_10 = arith.constant 0 : index
    %c0_11 = arith.constant 0 : index
    %16 = vector.load %arg6[%c0_10, %c0_11] : memref<1x128xf32, #tpu.memory_space<vmem>>, vector<1x128xf32>
    %17 = vector.broadcast %16 : vector<1x128xf32> to vector<16x128xf32>
    %18 = arith.mulf %15, %17 : vector<16x128xf32>
    %c0_12 = arith.constant 0 : index
    %c0_13 = arith.constant 0 : index
    %19 = vector.load %arg7[%c0_12, %c0_13] : memref<1x128xf32, #tpu.memory_space<vmem>>, vector<1x128xf32>
    %20 = vector.broadcast %19 : vector<1x128xf32> to vector<16x128xf32>
    %21 = arith.addf %18, %20 : vector<16x128xf32>
    %cst_14 = arith.constant 0.000000e+00 : f32
    %22 = vector.broadcast %cst_14 : f32 to vector<16x128xf32>
    %23 = arith.maximumf %21, %22 : vector<16x128xf32>
    %24 = arith.truncf %23 : vector<16x128xf32> to vector<16x128xbf16>
    %c0_15 = arith.constant 0 : index
    %c0_16 = arith.constant 0 : index
    %25 = vector.load %arg8[%c0_15, %c0_16] : memref<128x128xbf16, #tpu.memory_space<vmem>>, vector<128x128xbf16>
    %cst_17 = arith.constant dense<0.000000e+00> : vector<16x128xf32>
    %26 = tpu.matmul %24, %25, %cst_17 {dimension_numbers = #tpu.dot_dimension_numbers<[1], [0], [0], [1], [0, 0, 1, 1], [], []>} : vector<16x128xbf16>, vector<128x128xbf16>, vector<16x128xf32> -> vector<16x128xf32>
    %c0_18 = arith.constant 0 : index
    %c0_19 = arith.constant 0 : index
    %27 = vector.load %arg9[%c0_18, %c0_19] : memref<1x128xf32, #tpu.memory_space<vmem>>, vector<1x128xf32>
    %28 = vector.broadcast %27 : vector<1x128xf32> to vector<16x128xf32>
    %29 = arith.addf %26, %28 : vector<16x128xf32>
    %30 = vector.extract_strided_slice %29 {offsets = [0, 0], sizes = [16, 2], strides = [1, 1]} : vector<16x128xf32> to vector<16x2xf32>
    %c0_20 = arith.constant 0 : index
    %c0_21 = arith.constant 0 : index
    %31 = vector.load %arg10[%c0_20, %c0_21] : memref<16x2xf32, #tpu.memory_space<vmem>>, vector<16x2xf32>
    tpu.vector_store %arg10[%c0_20, %c0_21], %30 {strides = array<i32>} : memref<16x2xf32, #tpu.memory_space<vmem>>, vector<16x2xf32>,
    return
  }
  func.func @transform_0(%arg0: i32) -> (i32, i32) {
    %c0_i32 = arith.constant 0 : i32
    %c0_i32_0 = arith.constant 0 : i32
    return %arg0, %c0_i32 : i32, i32
  }
  func.func @transform_1(%arg0: i32) -> (i32, i32) {
    %c0_i32 = arith.constant 0 : i32
    %c0_i32_0 = arith.constant 0 : i32
    %c0_i32_1 = arith.constant 0 : i32
    return %c0_i32, %c0_i32_0 : i32, i32
  }
  func.func @transform_2(%arg0: i32) -> (i32, i32) {
    %c0_i32 = arith.constant 0 : i32
    %c0_i32_0 = arith.constant 0 : i32
    %c0_i32_1 = arith.constant 0 : i32
    return %c0_i32, %c0_i32_0 : i32, i32
  }
  func.func @transform_3(%arg0: i32) -> (i32, i32) {
    %c0_i32 = arith.constant 0 : i32
    %c0_i32_0 = arith.constant 0 : i32
    %c0_i32_1 = arith.constant 0 : i32
    return %c0_i32, %c0_i32_0 : i32, i32
  }
  func.func @transform_4(%arg0: i32) -> (i32, i32) {
    %c0_i32 = arith.constant 0 : i32
    %c0_i32_0 = arith.constant 0 : i32
    %c0_i32_1 = arith.constant 0 : i32
    return %c0_i32, %c0_i32_0 : i32, i32
  }
  func.func @transform_5(%arg0: i32) -> (i32, i32) {
    %c0_i32 = arith.constant 0 : i32
    %c0_i32_0 = arith.constant 0 : i32
    %c0_i32_1 = arith.constant 0 : i32
    return %c0_i32, %c0_i32_0 : i32, i32
  }
  func.func @transform_6(%arg0: i32) -> (i32, i32) {
    %c0_i32 = arith.constant 0 : i32
    %c0_i32_0 = arith.constant 0 : i32
    %c0_i32_1 = arith.constant 0 : i32
    return %c0_i32, %c0_i32_0 : i32, i32
  }
  func.func @transform_7(%arg0: i32) -> (i32, i32) {
    %c0_i32 = arith.constant 0 : i32
    %c0_i32_0 = arith.constant 0 : i32
    %c0_i32_1 = arith.constant 0 : i32
    return %c0_i32, %c0_i32_0 : i32, i32
  }
  func.func @transform_8(%arg0: i32) -> (i32, i32) {
    %c0_i32 = arith.constant 0 : i32
    %c0_i32_0 = arith.constant 0 : i32
    %c0_i32_1 = arith.constant 0 : i32
    return %c0_i32, %c0_i32_0 : i32, i32
  }
  func.func @transform_9(%arg0: i32) -> (i32, i32) {
    %c0_i32 = arith.constant 0 : i32
    %c0_i32_0 = arith.constant 0 : i32
    return %arg0, %c0_i32 : i32, i32
  }
}

</mosaic_0001>

<llo_original>
// kernel: basic_nn_road_segmentation.4
$region0: #{basic_nn_road_segmentation.4}
  #allocation0 [shape = 'u32[]', space=smem, size = 0x4, offset = 0x4, fixed_abs, tag = 'smem constant byte address 0x4 - core index']
  #allocation1 [shape = 'u32[144,128]{1,0:T(1,128)}', space=vmem, size = 0x12000, scoped, tag = 'internal scratch']
  %s0 = inlined_call_operand.vmem [shape: bf16[16,128], index: 0, kind: input, shape index: {}]
  %s1 = inlined_call_operand.vmem [shape: f32[1,128], index: 1, kind: input, shape index: {}]
  %s2 = inlined_call_operand.vmem [shape: f32[1,128], index: 2, kind: input, shape index: {}]
  %s3 = inlined_call_operand.vmem [shape: bf16[128,128], index: 3, kind: input, shape index: {}]
  %s4 = inlined_call_operand.vmem [shape: f32[1,128], index: 4, kind: input, shape index: {}]
  %s5 = inlined_call_operand.vmem [shape: f32[1,8,128], index: 5, kind: output, shape index: {0}]
  %s6 = inlined_call_operand.vmem [shape: f32[1,8,128], index: 6, kind: output, shape index: {1}]
  %7 = xla_tuple %s5, %s6
  %s8 = sld [smem:[#allocation0]]
  $region38: #{basic_nn_road_segmentation.4} parent=0
    _
  %s10 = ssub.s32 1, %s8
  %s11 = scalar_select 0, %s10, %s8
  // Predicated region
  $region2: #{basic_nn_road_segmentation.4} parent=0 // pred_check
    _
  $region3: #{basic_nn_road_segmentation.4} parent=0 // pred_check_branch
    %13 = sbr.rel (0) target = $region5
  $region4: #{basic_nn_road_segmentation.4} parent=0 // pred_region
    _
  $region5: #{basic_nn_road_segmentation.4} parent=0 // pred_fallthru
    _
  // Predicated region
  $region6: #{basic_nn_road_segmentation.4} parent=0 // pred_check
    _
  $region7: #{basic_nn_road_segmentation.4} parent=0 // pred_check_branch
    %15 = sbr.rel (0) target = $region9
  $region8: #{basic_nn_road_segmentation.4} parent=0 // pred_region
    _
  $region9: #{basic_nn_road_segmentation.4} parent=0 // pred_fallthru
    _
  // Predicated region
  $region10: #{basic_nn_road_segmentation.4} parent=0 // pred_check
    _
  $region11: #{basic_nn_road_segmentation.4} parent=0 // pred_check_branch
    %17 = sbr.rel (0) target = $region13
  $region12: #{basic_nn_road_segmentation.4} parent=0 // pred_region
    _
  $region13: #{basic_nn_road_segmentation.4} parent=0 // pred_fallthru
    _
  // Predicated region
  $region14: #{basic_nn_road_segmentation.4} parent=0 // pred_check
    _
  $region15: #{basic_nn_road_segmentation.4} parent=0 // pred_check_branch
    %19 = sbr.rel (0) target = $region17
  $region16: #{basic_nn_road_segmentation.4} parent=0 // pred_region
    _
  $region17: #{basic_nn_road_segmentation.4} parent=0 // pred_fallthru
    _
  // Predicated region
  $region18: #{basic_nn_road_segmentation.4} parent=0 // pred_check
    _
  $region19: #{basic_nn_road_segmentation.4} parent=0 // pred_check_branch
    %21 = sbr.rel (0) target = $region21
  $region20: #{basic_nn_road_segmentation.4} parent=0 // pred_region
    _
  $region21: #{basic_nn_road_segmentation.4} parent=0 // pred_fallthru
    _
  %v23 = vld [vmem:[%s0] sm:$0xf]
  %v24 = vld [vmem:[%s0 + $0x4] sm:$0xf]
  %v25 = vunpack.c.l.bf16 %v23
  %v26 = vunpack.c.l.bf16 %v24
  %v27 = vld [vmem:[%s1] sm:$0x1]
  %v29 = vlaneseq
  %v30 = vshrl.u32 %v29, 7
  %v31 = vsub.s32 0, %v30
  %v32 = vrot.slane %v27, %v31
  %v34 = vmul.f32 %v25, %v32
  %v35 = vmul.f32 %v26, %v32
  %v36 = vld [vmem:[%s2] sm:$0x1]
  %v38 = vlaneseq
  %v39 = vshrl.u32 %v38, 7
  %v40 = vsub.s32 0, %v39
  %v41 = vrot.slane %v36, %v40
  %v43 = vadd.f32 %v34, %v41
  %v44 = vadd.f32 %v35, %v41
  %v45 = vmax.f32 %v43, 0.0
  %v46 = vmax.f32 %v44, 0.0
  %v47 = vpack.c.bf16 %v46, %v45
  %v48 = vld [vmem:[%s3] sm:$0xf]
  %v49 = vld [vmem:[%s3 + $0x4] sm:$0xf]
  %v50 = vld [vmem:[%s3 + $0x8] sm:$0xf]
  %v51 = vld [vmem:[%s3 + $0xc] sm:$0xf]
  %v52 = vld [vmem:[%s3 + $0x10] sm:$0xf]
  %v53 = vld [vmem:[%s3 + $0x14] sm:$0xf]
  %v54 = vld [vmem:[%s3 + $0x18] sm:$0xf]
  %v55 = vld [vmem:[%s3 + $0x1c] sm:$0xf]
  %v56 = vld [vmem:[%s3 + $0x20] sm:$0xf]
  %v57 = vld [vmem:[%s3 + $0x24] sm:$0xf]
  %v58 = vld [vmem:[%s3 + $0x28] sm:$0xf]
  %v59 = vld [vmem:[%s3 + $0x2c] sm:$0xf]
  %v60 = vld [vmem:[%s3 + $0x30] sm:$0xf]
  %v61 = vld [vmem:[%s3 + $0x34] sm:$0xf]
  %v62 = vld [vmem:[%s3 + $0x38] sm:$0xf]
  %v63 = vld [vmem:[%s3 + $0x3c] sm:$0xf]
  %v64 = vld [vmem:[%s4] sm:$0x1]
  %v66 = vlaneseq
  %v67 = vshrl.u32 %v66, 7
  %v68 = vsub.s32 0, %v67
  %v69 = vrot.slane %v64, %v68
  %v87 = vunpack.c.l.b16 %v48
  %v88 = vunpack.c.l.b16 %v49
  %v89 = vunpack.c.l.b16 %v50
  %v90 = vunpack.c.l.b16 %v51
  %v91 = vunpack.c.l.b16 %v52
  %v92 = vunpack.c.l.b16 %v53
  %v93 = vunpack.c.l.b16 %v54
  %v94 = vunpack.c.l.b16 %v55
  %v95 = vunpack.c.l.b16 %v56
  %v96 = vunpack.c.l.b16 %v57
  %v97 = vunpack.c.l.b16 %v58
  %v98 = vunpack.c.l.b16 %v59
  %v99 = vunpack.c.l.b16 %v60
  %v100 = vunpack.c.l.b16 %v61
  %v101 = vunpack.c.l.b16 %v62
  %v102 = vunpack.c.l.b16 %v63
  %v103 = vpack.c.b16 %v88, %v87
  %v104 = vpack.c.b16 %v90, %v89
  %v105 = vpack.c.b16 %v92, %v91
  %v106 = vpack.c.b16 %v94, %v93
  %v107 = vpack.c.b16 %v96, %v95
  %v108 = vpack.c.b16 %v98, %v97
  %v109 = vpack.c.b16 %v100, %v99
  %v110 = vpack.c.b16 %v102, %v101
  %119 = vmatprep.subr.bf16.mxu0 0
  %120 = vmatpush1.bf16.msra.mxu0 %v110
  %121 = vmatprep.subr.bf16.mxu0 0
  %122 = vmatpush1.bf16.msra.mxu0 %v109
  %123 = vmatprep.subr.bf16.mxu0 0
  %124 = vmatpush1.bf16.msra.mxu0 %v108
  %125 = vmatprep.subr.bf16.mxu0 0
  %126 = vmatpush1.bf16.msra.mxu0 %v107
  %127 = vmatprep.subr.bf16.mxu0 0
  %128 = vmatpush1.bf16.msra.mxu0 %v106
  %129 = vmatprep.subr.bf16.mxu0 0
  %130 = vmatpush1.bf16.msra.mxu0 %v105
  %131 = vmatprep.subr.bf16.mxu0 0
  %132 = vmatpush1.bf16.msra.mxu0 %v104
  %133 = vmatprep.subr.bf16.mxu0 0
  %134 = vmatpush1.bf16.msra.mxu0 %v103
  %135 = vmatprep.subr.bf16.mxu0 0
  %136 = vmatpush2.bf16.msra.mxu0 0
  %137 = vmatprep.subr.bf16.mxu0 0
  %138 = vmatpush2.bf16.msra.mxu0 0
  %139 = vmatprep.subr.bf16.mxu0 0
  %140 = vmatpush2.bf16.msra.mxu0 0
  %141 = vmatprep.subr.bf16.mxu0 0
  %142 = vmatpush2.bf16.msra.mxu0 0
  %143 = vmatprep.subr.bf16.mxu0 0
  %144 = vmatpush2.bf16.msra.mxu0 0
  %145 = vmatprep.subr.bf16.mxu0 0
  %146 = vmatpush2.bf16.msra.mxu0 0
  %147 = vmatprep.subr.bf16.mxu0 0
  %148 = vmatpush2.bf16.msra.mxu0 0
  %149 = vmatprep.subr.bf16.mxu0 0
  %150 = vmatpush2.bf16.msra.mxu0 0
  %151 = vmatprep.mubr.bf16.mxu0 0
  %152 = vmatmul.mubr.bf16.gmra.mxu0 %v47
  %v153 = vpop.f32.mrf.mxu0
  %v154 = vadd.f32 %v69, %v153
  %v155 = vpop.f32.mrf.mxu0
  %v156 = vpop.f32.mrf.mxu0
  %v157 = vadd.f32 %v69, %v156
  %v158 = vpop.f32.mrf.mxu0
  %159 = vdwg.mxu0
  %v160 = vadd.f32 %v154, %v157
  %v161 = vrot.slane %v160, 4
  %v162 = vadd.f32 %v160, %v161
  %v163 = vrot.slane %v162, 2
  %v164 = vadd.f32 %v162, %v163
  %v165 = vrot.slane %v164, 1
  %v166 = vadd.f32 %v164, %v165
  %v167 = vmul.f32 %v154, %v154
  %v168 = vmul.f32 %v157, %v157
  %v169 = vadd.f32 %v167, %v168
  %v170 = vrot.slane %v169, 4
  %v171 = vadd.f32 %v169, %v170
  %v172 = vrot.slane %v171, 2
  %v173 = vadd.f32 %v171, %v172
  %v174 = vrot.slane %v173, 1
  %v175 = vadd.f32 %v173, %v174
  %176 = vst [vmem:[%s5] sm:$0xff] %v166
  %177 = vst [vmem:[%s6] sm:$0xff] %v175
  // Predicated region
  $region22: #{basic_nn_road_segmentation.4} parent=0 // pred_check
    _
  $region23: #{basic_nn_road_segmentation.4} parent=0 // pred_check_branch
    %179 = sbr.rel (0) target = $region25
  $region24: #{basic_nn_road_segmentation.4} parent=0 // pred_region
    _
  $region25: #{basic_nn_road_segmentation.4} parent=0 // pred_fallthru
    _
  // Predicated region
  $region26: #{basic_nn_road_segmentation.4} parent=0 // pred_check
    _
  $region27: #{basic_nn_road_segmentation.4} parent=0 // pred_check_branch
    %181 = sbr.rel (0) target = $region29
  $region28: #{basic_nn_road_segmentation.4} parent=0 // pred_region
    _
  $region29: #{basic_nn_road_segmentation.4} parent=0 // pred_fallthru
    _
  // Predicated region
  $region30: #{basic_nn_road_segmentation.4} parent=0 // pred_check
    _
  $region31: #{basic_nn_road_segmentation.4} parent=0 // pred_check_branch
    %183 = sbr.rel (0) target = $region33
  $region32: #{basic_nn_road_segmentation.4} parent=0 // pred_region
    _
  $region33: #{basic_nn_road_segmentation.4} parent=0 // pred_fallthru
    _
  // Predicated region
  $region34: #{basic_nn_road_segmentation.4} parent=0 // pred_check
    _
  $region35: #{basic_nn_road_segmentation.4} parent=0 // pred_check_branch
    %185 = sbr.rel (0) target = $region37
  $region36: #{basic_nn_road_segmentation.4} parent=0 // pred_region
    _
  $region37: #{basic_nn_road_segmentation.4} parent=0 // pred_fallthru
    _

// kernel: basic_nn_road_segmentation.3
$region0: #{basic_nn_road_segmentation.3}
  #allocation0 [shape = 'u32[]', space=smem, size = 0x4, offset = 0x4, fixed_abs, tag = 'smem constant byte address 0x4 - core index']
  #allocation1 [shape = 'u32[144,128]{1,0:T(1,128)}', space=vmem, size = 0x12000, scoped, tag = 'internal scratch']
  %s0 = inlined_call_operand.vmem [shape: f32[16,768], index: 0, kind: input, shape index: {}]
  %s1 = inlined_call_operand.vmem [shape: bf16[768,128], index: 1, kind: input, shape index: {}]
  %s2 = inlined_call_operand.vmem [shape: f32[1,128], index: 2, kind: input, shape index: {}]
  %s3 = inlined_call_operand.vmem [shape: bf16[16,128], index: 3, kind: output, shape index: {0}]
  %s4 = inlined_call_operand.vmem [shape: f32[1,8,128], index: 4, kind: output, shape index: {1}]
  %s5 = inlined_call_operand.vmem [shape: f32[1,8,128], index: 5, kind: output, shape index: {2}]
  %6 = xla_tuple %s3, %s4, %s5
  %s7 = sld [smem:[#allocation0]]
  $region38: #{basic_nn_road_segmentation.3} parent=0
    _
  %s9 = ssub.s32 1, %s7
  %s10 = scalar_select 0, %s9, %s7
  // Predicated region
  $region2: #{basic_nn_road_segmentation.3} parent=0 // pred_check
    _
  $region3: #{basic_nn_road_segmentation.3} parent=0 // pred_check_branch
    %12 = sbr.rel (0) target = $region5
  $region4: #{basic_nn_road_segmentation.3} parent=0 // pred_region
    _
  $region5: #{basic_nn_road_segmentation.3} parent=0 // pred_fallthru
    _
  // Predicated region
  $region6: #{basic_nn_road_segmentation.3} parent=0 // pred_check
    _
  $region7: #{basic_nn_road_segmentation.3} parent=0 // pred_check_branch
    %14 = sbr.rel (0) target = $region9
  $region8: #{basic_nn_road_segmentation.3} parent=0 // pred_region
    _
  $region9: #{basic_nn_road_segmentation.3} parent=0 // pred_fallthru
    _
  // Predicated region
  $region10: #{basic_nn_road_segmentation.3} parent=0 // pred_check
    _
  $region11: #{basic_nn_road_segmentation.3} parent=0 // pred_check_branch
    %16 = sbr.rel (0) target = $region13
  $region12: #{basic_nn_road_segmentation.3} parent=0 // pred_region
    _
  $region13: #{basic_nn_road_segmentation.3} parent=0 // pred_fallthru
    _
  %v18 = vld [vmem:[%s0] sm:$0xff]
  %v19 = vld [vmem:[%s0 + $0x8] sm:$0xff]
  %v20 = vld [vmem:[%s0 + $0x10] sm:$0xff]
  %v21 = vld [vmem:[%s0 + $0x18] sm:$0xff]
  %v22 = vld [vmem:[%s0 + $0x20] sm:$0xff]
  %v23 = vld [vmem:[%s0 + $0x28] sm:$0xff]
  %v24 = vld [vmem:[%s0 + $0x30] sm:$0xff]
  %v25 = vld [vmem:[%s0 + $0x38] sm:$0xff]
  %v26 = vld [vmem:[%s0 + $0x40] sm:$0xff]
  %v27 = vld [vmem:[%s0 + $0x48] sm:$0xff]
  %v28 = vld [vmem:[%s0 + $0x50] sm:$0xff]
  %v29 = vld [vmem:[%s0 + $0x58] sm:$0xff]
  %v30 = vpack.c.bf16 %v24, %v18
  %v31 = vpack.c.bf16 %v25, %v19
  %v32 = vpack.c.bf16 %v26, %v20
  %v33 = vpack.c.bf16 %v27, %v21
  %v34 = vpack.c.bf16 %v28, %v22
  %v35 = vpack.c.bf16 %v29, %v23
  %v36 = vld [vmem:[%s1] sm:$0xf]
  %v37 = vld [vmem:[%s1 + $0x4] sm:$0xf]
  %v38 = vld [vmem:[%s1 + $0x8] sm:$0xf]
  %v39 = vld [vmem:[%s1 + $0xc] sm:$0xf]
  %v40 = vld [vmem:[%s1 + $0x10] sm:$0xf]
  %v41 = vld [vmem:[%s1 + $0x14] sm:$0xf]
  %v42 = vld [vmem:[%s1 + $0x18] sm:$0xf]
  %v43 = vld [vmem:[%s1 + $0x1c] sm:$0xf]
  %v44 = vld [vmem:[%s1 + $0x20] sm:$0xf]
  %v45 = vld [vmem:[%s1 + $0x24] sm:$0xf]
  %v46 = vld [vmem:[%s1 + $0x28] sm:$0xf]
  %v47 = vld [vmem:[%s1 + $0x2c] sm:$0xf]
  %v48 = vld [vmem:[%s1 + $0x30] sm:$0xf]
  %v49 = vld [vmem:[%s1 + $0x34] sm:$0xf]
  %v50 = vld [vmem:[%s1 + $0x38] sm:$0xf]
  %v51 = vld [vmem:[%s1 + $0x3c] sm:$0xf]
  %v52 = vld [vmem:[%s1 + $0x40] sm:$0xf]
  %v53 = vld [vmem:[%s1 + $0x44] sm:$0xf]
  %v54 = vld [vmem:[%s1 + $0x48] sm:$0xf]
  %v55 = vld [vmem:[%s1 + $0x4c] sm:$0xf]
  %v56 = vld [vmem:[%s1 + $0x50] sm:$0xf]
  %v57 = vld [vmem:[%s1 + $0x54] sm:$0xf]
  %v58 = vld [vmem:[%s1 + $0x58] sm:$0xf]
  %v59 = vld [vmem:[%s1 + $0x5c] sm:$0xf]
  %v60 = vld [vmem:[%s1 + $0x60] sm:$0xf]
  %v61 = vld [vmem:[%s1 + $0x64] sm:$0xf]
  %v62 = vld [vmem:[%s1 + $0x68] sm:$0xf]
  %v63 = vld [vmem:[%s1 + $0x6c] sm:$0xf]
  %v64 = vld [vmem:[%s1 + $0x70] sm:$0xf]
  %v65 = vld [vmem:[%s1 + $0x74] sm:$0xf]
  %v66 = vld [vmem:[%s1 + $0x78] sm:$0xf]
  %v67 = vld [vmem:[%s1 + $0x7c] sm:$0xf]
  %v68 = vld [vmem:[%s1 + $0x80] sm:$0xf]
  %v69 = vld [vmem:[%s1 + $0x84] sm:$0xf]
  %v70 = vld [vmem:[%s1 + $0x88] sm:$0xf]
  %v71 = vld [vmem:[%s1 + $0x8c] sm:$0xf]
  %v72 = vld [vmem:[%s1 + $0x90] sm:$0xf]
  %v73 = vld [vmem:[%s1 + $0x94] sm:$0xf]
  %v74 = vld [vmem:[%s1 + $0x98] sm:$0xf]
  %v75 = vld [vmem:[%s1 + $0x9c] sm:$0xf]
  %v76 = vld [vmem:[%s1 + $0xa0] sm:$0xf]
  %v77 = vld [vmem:[%s1 + $0xa4] sm:$0xf]
  %v78 = vld [vmem:[%s1 + $0xa8] sm:$0xf]
  %v79 = vld [vmem:[%s1 + $0xac] sm:$0xf]
  %v80 = vld [vmem:[%s1 + $0xb0] sm:$0xf]
  %v81 = vld [vmem:[%s1 + $0xb4] sm:$0xf]
  %v82 = vld [vmem:[%s1 + $0xb8] sm:$0xf]
  %v83 = vld [vmem:[%s1 + $0xbc] sm:$0xf]
  %v84 = vld [vmem:[%s1 + $0xc0] sm:$0xf]
  %v85 = vld [vmem:[%s1 + $0xc4] sm:$0xf]
  %v86 = vld [vmem:[%s1 + $0xc8] sm:$0xf]
  %v87 = vld [vmem:[%s1 + $0xcc] sm:$0xf]
  %v88 = vld [vmem:[%s1 + $0xd0] sm:$0xf]
  %v89 = vld [vmem:[%s1 + $0xd4] sm:$0xf]
  %v90 = vld [vmem:[%s1 + $0xd8] sm:$0xf]
  %v91 = vld [vmem:[%s1 + $0xdc] sm:$0xf]
  %v92 = vld [vmem:[%s1 + $0xe0] sm:$0xf]
  %v93 = vld [vmem:[%s1 + $0xe4] sm:$0xf]
  %v94 = vld [vmem:[%s1 + $0xe8] sm:$0xf]
  %v95 = vld [vmem:[%s1 + $0xec] sm:$0xf]
  %v96 = vld [vmem:[%s1 + $0xf0] sm:$0xf]
  %v97 = vld [vmem:[%s1 + $0xf4] sm:$0xf]
  %v98 = vld [vmem:[%s1 + $0xf8] sm:$0xf]
  %v99 = vld [vmem:[%s1 + $0xfc] sm:$0xf]
  %v100 = vld [vmem:[%s1 + $0x100] sm:$0xf]
  %v101 = vld [vmem:[%s1 + $0x104] sm:$0xf]
  %v102 = vld [vmem:[%s1 + $0x108] sm:$0xf]
  %v103 = vld [vmem:[%s1 + $0x10c] sm:$0xf]
  %v104 = vld [vmem:[%s1 + $0x110] sm:$0xf]
  %v105 = vld [vmem:[%s1 + $0x114] sm:$0xf]
  %v106 = vld [vmem:[%s1 + $0x118] sm:$0xf]
  %v107 = vld [vmem:[%s1 + $0x11c] sm:$0xf]
  %v108 = vld [vmem:[%s1 + $0x120] sm:$0xf]
  %v109 = vld [vmem:[%s1 + $0x124] sm:$0xf]
  %v110 = vld [vmem:[%s1 + $0x128] sm:$0xf]
  %v111 = vld [vmem:[%s1 + $0x12c] sm:$0xf]
  %v112 = vld [vmem:[%s1 + $0x130] sm:$0xf]
  %v113 = vld [vmem:[%s1 + $0x134] sm:$0xf]
  %v114 = vld [vmem:[%s1 + $0x138] sm:$0xf]
  %v115 = vld [vmem:[%s1 + $0x13c] sm:$0xf]
  %v116 = vld [vmem:[%s1 + $0x140] sm:$0xf]
  %v117 = vld [vmem:[%s1 + $0x144] sm:$0xf]
  %v118 = vld [vmem:[%s1 + $0x148] sm:$0xf]
  %v119 = vld [vmem:[%s1 + $0x14c] sm:$0xf]
  %v120 = vld [vmem:[%s1 + $0x150] sm:$0xf]
  %v121 = vld [vmem:[%s1 + $0x154] sm:$0xf]
  %v122 = vld [vmem:[%s1 + $0x158] sm:$0xf]
  %v123 = vld [vmem:[%s1 + $0x15c] sm:$0xf]
  %v124 = vld [vmem:[%s1 + $0x160] sm:$0xf]
  %v125 = vld [vmem:[%s1 + $0x164] sm:$0xf]
  %v126 = vld [vmem:[%s1 + $0x168] sm:$0xf]
  %v127 = vld [vmem:[%s1 + $0x16c] sm:$0xf]
  %v128 = vld [vmem:[%s1 + $0x170] sm:$0xf]
  %v129 = vld [vmem:[%s1 + $0x174] sm:$0xf]
  %v130 = vld [vmem:[%s1 + $0x178] sm:$0xf]
  %v131 = vld [vmem:[%s1 + $0x17c] sm:$0xf]
  %v132 = vld [vmem:[%s2] sm:$0x1]
  %v134 = vlaneseq
  %v135 = vshrl.u32 %v134, 7
  %v136 = vsub.s32 0, %v135
  %v137 = vrot.slane %v132, %v136
  %v235 = vunpack.c.l.b16 %v36
  %v236 = vunpack.c.l.b16 %v37
  %v237 = vunpack.c.l.b16 %v38
  %v238 = vunpack.c.l.b16 %v39
  %v239 = vunpack.c.l.b16 %v40
  %v240 = vunpack.c.l.b16 %v41
  %v241 = vunpack.c.l.b16 %v42
  %v242 = vunpack.c.l.b16 %v43
  %v243 = vunpack.c.l.b16 %v44
  %v244 = vunpack.c.l.b16 %v45
  %v245 = vunpack.c.l.b16 %v46
  %v246 = vunpack.c.l.b16 %v47
  %v247 = vunpack.c.l.b16 %v48
  %v248 = vunpack.c.l.b16 %v49
  %v249 = vunpack.c.l.b16 %v50
  %v250 = vunpack.c.l.b16 %v51
  %v251 = vunpack.c.l.b16 %v52
  %v252 = vunpack.c.l.b16 %v53
  %v253 = vunpack.c.l.b16 %v54
  %v254 = vunpack.c.l.b16 %v55
  %v255 = vunpack.c.l.b16 %v56
  %v256 = vunpack.c.l.b16 %v57
  %v257 = vunpack.c.l.b16 %v58
  %v258 = vunpack.c.l.b16 %v59
  %v259 = vunpack.c.l.b16 %v60
  %v260 = vunpack.c.l.b16 %v61
  %v261 = vunpack.c.l.b16 %v62
  %v262 = vunpack.c.l.b16 %v63
  %v263 = vunpack.c.l.b16 %v64
  %v264 = vunpack.c.l.b16 %v65
  %v265 = vunpack.c.l.b16 %v66
  %v266 = vunpack.c.l.b16 %v67
  %v267 = vunpack.c.l.b16 %v68
  %v268 = vunpack.c.l.b16 %v69
  %v269 = vunpack.c.l.b16 %v70
  %v270 = vunpack.c.l.b16 %v71
  %v271 = vunpack.c.l.b16 %v72
  %v272 = vunpack.c.l.b16 %v73
  %v273 = vunpack.c.l.b16 %v74
  %v274 = vunpack.c.l.b16 %v75
  %v275 = vunpack.c.l.b16 %v76
  %v276 = vunpack.c.l.b16 %v77
  %v277 = vunpack.c.l.b16 %v78
  %v278 = vunpack.c.l.b16 %v79
  %v279 = vunpack.c.l.b16 %v80
  %v280 = vunpack.c.l.b16 %v81
  %v281 = vunpack.c.l.b16 %v82
  %v282 = vunpack.c.l.b16 %v83
  %v283 = vunpack.c.l.b16 %v84
  %v284 = vunpack.c.l.b16 %v85
  %v285 = vunpack.c.l.b16 %v86
  %v286 = vunpack.c.l.b16 %v87
  %v287 = vunpack.c.l.b16 %v88
  %v288 = vunpack.c.l.b16 %v89
  %v289 = vunpack.c.l.b16 %v90
  %v290 = vunpack.c.l.b16 %v91
  %v291 = vunpack.c.l.b16 %v92
  %v292 = vunpack.c.l.b16 %v93
  %v293 = vunpack.c.l.b16 %v94
  %v294 = vunpack.c.l.b16 %v95
  %v295 = vunpack.c.l.b16 %v96
  %v296 = vunpack.c.l.b16 %v97
  %v297 = vunpack.c.l.b16 %v98
  %v298 = vunpack.c.l.b16 %v99
  %v299 = vunpack.c.l.b16 %v100
  %v300 = vunpack.c.l.b16 %v101
  %v301 = vunpack.c.l.b16 %v102
  %v302 = vunpack.c.l.b16 %v103
  %v303 = vunpack.c.l.b16 %v104
  %v304 = vunpack.c.l.b16 %v105
  %v305 = vunpack.c.l.b16 %v106
  %v306 = vunpack.c.l.b16 %v107
  %v307 = vunpack.c.l.b16 %v108
  %v308 = vunpack.c.l.b16 %v109
  %v309 = vunpack.c.l.b16 %v110
  %v310 = vunpack.c.l.b16 %v111
  %v311 = vunpack.c.l.b16 %v112
  %v312 = vunpack.c.l.b16 %v113
  %v313 = vunpack.c.l.b16 %v114
  %v314 = vunpack.c.l.b16 %v115
  %v315 = vunpack.c.l.b16 %v116
  %v316 = vunpack.c.l.b16 %v117
  %v317 = vunpack.c.l.b16 %v118
  %v318 = vunpack.c.l.b16 %v119
  %v319 = vunpack.c.l.b16 %v120
  %v320 = vunpack.c.l.b16 %v121
  %v321 = vunpack.c.l.b16 %v122
  %v322 = vunpack.c.l.b16 %v123
  %v323 = vunpack.c.l.b16 %v124
  %v324 = vunpack.c.l.b16 %v125
  %v325 = vunpack.c.l.b16 %v126
  %v326 = vunpack.c.l.b16 %v127
  %v327 = vunpack.c.l.b16 %v128
  %v328 = vunpack.c.l.b16 %v129
  %v329 = vunpack.c.l.b16 %v130
  %v330 = vunpack.c.l.b16 %v131
  %v331 = vpack.c.b16 %v236, %v235
  %v332 = vpack.c.b16 %v238, %v237
  %v333 = vpack.c.b16 %v240, %v239
  %v334 = vpack.c.b16 %v242, %v241
  %v335 = vpack.c.b16 %v244, %v243
  %v336 = vpack.c.b16 %v246, %v245
  %v337 = vpack.c.b16 %v248, %v247
  %v338 = vpack.c.b16 %v250, %v249
  %v339 = vpack.c.b16 %v252, %v251
  %v340 = vpack.c.b16 %v254, %v253
  %v341 = vpack.c.b16 %v256, %v255
  %v342 = vpack.c.b16 %v258, %v257
  %v343 = vpack.c.b16 %v260, %v259
  %v344 = vpack.c.b16 %v262, %v261
  %v345 = vpack.c.b16 %v264, %v263
  %v346 = vpack.c.b16 %v266, %v265
  %v347 = vpack.c.b16 %v268, %v267
  %v348 = vpack.c.b16 %v270, %v269
  %v349 = vpack.c.b16 %v272, %v271
  %v350 = vpack.c.b16 %v274, %v273
  %v351 = vpack.c.b16 %v276, %v275
  %v352 = vpack.c.b16 %v278, %v277
  %v353 = vpack.c.b16 %v280, %v279
  %v354 = vpack.c.b16 %v282, %v281
  %v355 = vpack.c.b16 %v284, %v283
  %v356 = vpack.c.b16 %v286, %v285
  %v357 = vpack.c.b16 %v288, %v287
  %v358 = vpack.c.b16 %v290, %v289
  %v359 = vpack.c.b16 %v292, %v291
  %v360 = vpack.c.b16 %v294, %v293
  %v361 = vpack.c.b16 %v296, %v295
  %v362 = vpack.c.b16 %v298, %v297
  %v363 = vpack.c.b16 %v300, %v299
  %v364 = vpack.c.b16 %v302, %v301
  %v365 = vpack.c.b16 %v304, %v303
  %v366 = vpack.c.b16 %v306, %v305
  %v367 = vpack.c.b16 %v308, %v307
  %v368 = vpack.c.b16 %v310, %v309
  %v369 = vpack.c.b16 %v312, %v311
  %v370 = vpack.c.b16 %v314, %v313
  %v371 = vpack.c.b16 %v316, %v315
  %v372 = vpack.c.b16 %v318, %v317
  %v373 = vpack.c.b16 %v320, %v319
  %v374 = vpack.c.b16 %v322, %v321
  %v375 = vpack.c.b16 %v324, %v323
  %v376 = vpack.c.b16 %v326, %v325
  %v377 = vpack.c.b16 %v328, %v327
  %v378 = vpack.c.b16 %v330, %v329
  %427 = vmatprep.subr.bf16.mxu0 0
  %428 = vmatpush1.bf16.msra.mxu0 %v338
  %429 = vmatprep.subr.bf16.mxu0 0
  %430 = vmatpush1.bf16.msra.mxu0 %v337
  %431 = vmatprep.subr.bf16.mxu0 0
  %432 = vmatpush1.bf16.msra.mxu0 %v336
  %433 = vmatprep.subr.bf16.mxu0 0
  %434 = vmatpush1.bf16.msra.mxu0 %v335
  %435 = vmatprep.subr.bf16.mxu0 0
  %436 = vmatpush1.bf16.msra.mxu0 %v334
  %437 = vmatprep.subr.bf16.mxu0 0
  %438 = vmatpush1.bf16.msra.mxu0 %v333
  %439 = vmatprep.subr.bf16.mxu0 0
  %440 = vmatpush1.bf16.msra.mxu0 %v332
  %441 = vmatprep.subr.bf16.mxu0 0
  %442 = vmatpush1.bf16.msra.mxu0 %v331
  %443 = vmatprep.subr.bf16.mxu0 0
  %444 = vmatpush2.bf16.msra.mxu0 %v346
  %445 = vmatprep.subr.bf16.mxu0 0
  %446 = vmatpush2.bf16.msra.mxu0 %v345
  %447 = vmatprep.subr.bf16.mxu0 0
  %448 = vmatpush2.bf16.msra.mxu0 %v344
  %449 = vmatprep.subr.bf16.mxu0 0
  %450 = vmatpush2.bf16.msra.mxu0 %v343
  %451 = vmatprep.subr.bf16.mxu0 0
  %452 = vmatpush2.bf16.msra.mxu0 %v342
  %453 = vmatprep.subr.bf16.mxu0 0
  %454 = vmatpush2.bf16.msra.mxu0 %v341
  %455 = vmatprep.subr.bf16.mxu0 0
  %456 = vmatpush2.bf16.msra.mxu0 %v340
  %457 = vmatprep.subr.bf16.mxu0 0
  %458 = vmatpush2.bf16.msra.mxu0 %v339
  %459 = vmatprep.mubr.bf16.mxu0 %v31
  %460 = vmatmul.mubr.bf16.gmra.mxu0 %v30
  %v461 = vpop.f32.mrf.mxu0
  %v462 = vadd.f32 %v137, %v461
  %v463 = vpop.f32.mrf.mxu0
  %v464 = vpop.f32.mrf.mxu0
  %v465 = vadd.f32 %v137, %v464
  %v466 = vpop.f32.mrf.mxu0
  %467 = vdwg.mxu0
  %468 = vmatprep.subr.bf16.mxu0 0
  %469 = vmatpush1.bf16.msra.mxu0 %v354
  %470 = vmatprep.subr.bf16.mxu0 0
  %471 = vmatpush1.bf16.msra.mxu0 %v353
  %472 = vmatprep.subr.bf16.mxu0 0
  %473 = vmatpush1.bf16.msra.mxu0 %v352
  %474 = vmatprep.subr.bf16.mxu0 0
  %475 = vmatpush1.bf16.msra.mxu0 %v351
  %476 = vmatprep.subr.bf16.mxu0 0
  %477 = vmatpush1.bf16.msra.mxu0 %v350
  %478 = vmatprep.subr.bf16.mxu0 0
  %479 = vmatpush1.bf16.msra.mxu0 %v349
  %480 = vmatprep.subr.bf16.mxu0 0
  %481 = vmatpush1.bf16.msra.mxu0 %v348
  %482 = vmatprep.subr.bf16.mxu0 0
  %483 = vmatpush1.bf16.msra.mxu0 %v347
  %484 = vmatprep.subr.bf16.mxu0 0
  %485 = vmatpush2.bf16.msra.mxu0 %v362
  %486 = vmatprep.subr.bf16.mxu0 0
  %487 = vmatpush2.bf16.msra.mxu0 %v361
  %488 = vmatprep.subr.bf16.mxu0 0
  %489 = vmatpush2.bf16.msra.mxu0 %v360
  %490 = vmatprep.subr.bf16.mxu0 0
  %491 = vmatpush2.bf16.msra.mxu0 %v359
  %492 = vmatprep.subr.bf16.mxu0 0
  %493 = vmatpush2.bf16.msra.mxu0 %v358
  %494 = vmatprep.subr.bf16.mxu0 0
  %495 = vmatpush2.bf16.msra.mxu0 %v357
  %496 = vmatprep.subr.bf16.mxu0 0
  %497 = vmatpush2.bf16.msra.mxu0 %v356
  %498 = vmatprep.subr.bf16.mxu0 0
  %499 = vmatpush2.bf16.msra.mxu0 %v355
  %500 = vmatprep.mubr.bf16.mxu0 %v33
  %501 = vmatmul.mubr.bf16.gmra.mxu0 %v32
  %v502 = vpop.f32.mrf.mxu0
  %v503 = vadd.f32 %v462, %v502
  %v504 = vpop.f32.mrf.mxu0
  %v505 = vpop.f32.mrf.mxu0
  %v506 = vadd.f32 %v465, %v505
  %v507 = vpop.f32.mrf.mxu0
  %508 = vdwg.mxu0
  %509 = vmatprep.subr.bf16.mxu0 0
  %510 = vmatpush1.bf16.msra.mxu0 %v370
  %511 = vmatprep.subr.bf16.mxu0 0
  %512 = vmatpush1.bf16.msra.mxu0 %v369
  %513 = vmatprep.subr.bf16.mxu0 0
  %514 = vmatpush1.bf16.msra.mxu0 %v368
  %515 = vmatprep.subr.bf16.mxu0 0
  %516 = vmatpush1.bf16.msra.mxu0 %v367
  %517 = vmatprep.subr.bf16.mxu0 0
  %518 = vmatpush1.bf16.msra.mxu0 %v366
  %519 = vmatprep.subr.bf16.mxu0 0
  %520 = vmatpush1.bf16.msra.mxu0 %v365
  %521 = vmatprep.subr.bf16.mxu0 0
  %522 = vmatpush1.bf16.msra.mxu0 %v364
  %523 = vmatprep.subr.bf16.mxu0 0
  %524 = vmatpush1.bf16.msra.mxu0 %v363
  %525 = vmatprep.subr.bf16.mxu0 0
  %526 = vmatpush2.bf16.msra.mxu0 %v378
  %527 = vmatprep.subr.bf16.mxu0 0
  %528 = vmatpush2.bf16.msra.mxu0 %v377
  %529 = vmatprep.subr.bf16.mxu0 0
  %530 = vmatpush2.bf16.msra.mxu0 %v376
  %531 = vmatprep.subr.bf16.mxu0 0
  %532 = vmatpush2.bf16.msra.mxu0 %v375
  %533 = vmatprep.subr.bf16.mxu0 0
  %534 = vmatpush2.bf16.msra.mxu0 %v374
  %535 = vmatprep.subr.bf16.mxu0 0
  %536 = vmatpush2.bf16.msra.mxu0 %v373
  %537 = vmatprep.subr.bf16.mxu0 0
  %538 = vmatpush2.bf16.msra.mxu0 %v372
  %539 = vmatprep.subr.bf16.mxu0 0
  %540 = vmatpush2.bf16.msra.mxu0 %v371
  %541 = vmatprep.mubr.bf16.mxu0 %v35
  %542 = vmatmul.mubr.bf16.gmra.mxu0 %v34
  %v543 = vpop.f32.mrf.mxu0
  %v544 = vadd.f32 %v503, %v543
  %v545 = vpop.f32.mrf.mxu0
  %v546 = vpop.f32.mrf.mxu0
  %v547 = vadd.f32 %v506, %v546
  %v548 = vpop.f32.mrf.mxu0
  %549 = vdwg.mxu0
  %v550 = vpack.c.bf16 %v547, %v544
  %v552 = vunpack.c.l.b16 %v550
  %v553 = vunpack.c.h.b16 %v550
  %v554 = vpack.c.b16 %v552, %v552
  %v555 = vpack.c.b16 %v553, %v553
  %558 = vst [vmem:[%s3] sm:$0xf] %v554
  %559 = vst [vmem:[%s3 + $0x4] sm:$0xf] %v555
  %v560 = vadd.f32 %v544, %v547
  %v561 = vrot.slane %v560, 4
  %v562 = vadd.f32 %v560, %v561
  %v563 = vrot.slane %v562, 2
  %v564 = vadd.f32 %v562, %v563
  %v565 = vrot.slane %v564, 1
  %v566 = vadd.f32 %v564, %v565
  %v567 = vmul.f32 %v544, %v544
  %v568 = vmul.f32 %v547, %v547
  %v569 = vadd.f32 %v567, %v568
  %v570 = vrot.slane %v569, 4
  %v571 = vadd.f32 %v569, %v570
  %v572 = vrot.slane %v571, 2
  %v573 = vadd.f32 %v571, %v572
  %v574 = vrot.slane %v573, 1
  %v575 = vadd.f32 %v573, %v574
  %576 = vst [vmem:[%s4] sm:$0xff] %v566
  %577 = vst [vmem:[%s5] sm:$0xff] %v575
  // Predicated region
  $region14: #{basic_nn_road_segmentation.3} parent=0 // pred_check
    _
  $region15: #{basic_nn_road_segmentation.3} parent=0 // pred_check_branch
    %579 = sbr.rel (0) target = $region17
  $region16: #{basic_nn_road_segmentation.3} parent=0 // pred_region
    _
  $region17: #{basic_nn_road_segmentation.3} parent=0 // pred_fallthru
    _
  // Predicated region
  $region18: #{basic_nn_road_segmentation.3} parent=0 // pred_check
    _
  $region19: #{basic_nn_road_segmentation.3} parent=0 // pred_check_branch
    %581 = sbr.rel (0) target = $region21
  $region20: #{basic_nn_road_segmentation.3} parent=0 // pred_region
    _
  $region21: #{basic_nn_road_segmentation.3} parent=0 // pred_fallthru
    _
  // Predicated region
  $region22: #{basic_nn_road_segmentation.3} parent=0 // pred_check
    _
  $region23: #{basic_nn_road_segmentation.3} parent=0 // pred_check_branch
    %583 = sbr.rel (0) target = $region25
  $region24: #{basic_nn_road_segmentation.3} parent=0 // pred_region
    _
  $region25: #{basic_nn_road_segmentation.3} parent=0 // pred_fallthru
    _
  // Predicated region
  $region26: #{basic_nn_road_segmentation.3} parent=0 // pred_check
    _
  $region27: #{basic_nn_road_segmentation.3} parent=0 // pred_check_branch
    %585 = sbr.rel (0) target = $region29
  $region28: #{basic_nn_road_segmentation.3} parent=0 // pred_region
    _
  $region29: #{basic_nn_road_segmentation.3} parent=0 // pred_fallthru
    _
  // Predicated region
  $region30: #{basic_nn_road_segmentation.3} parent=0 // pred_check
    _
  $region31: #{basic_nn_road_segmentation.3} parent=0 // pred_check_branch
    %587 = sbr.rel (0) target = $region33
  $region32: #{basic_nn_road_segmentation.3} parent=0 // pred_region
    _
  $region33: #{basic_nn_road_segmentation.3} parent=0 // pred_fallthru
    _
  // Predicated region
  $region34: #{basic_nn_road_segmentation.3} parent=0 // pred_check
    _
  $region35: #{basic_nn_road_segmentation.3} parent=0 // pred_check_branch
    %589 = sbr.rel (0) target = $region37
  $region36: #{basic_nn_road_segmentation.3} parent=0 // pred_region
    _
  $region37: #{basic_nn_road_segmentation.3} parent=0 // pred_fallthru
    _

// kernel: basic_nn_road_segmentation.5
$region0: #{basic_nn_road_segmentation.5}
  #allocation0 [shape = 'u32[]', space=smem, size = 0x4, offset = 0x4, fixed_abs, tag = 'smem constant byte address 0x4 - core index']
  #allocation1 [shape = 'u32[144,128]{1,0:T(1,128)}', space=vmem, size = 0x12000, scoped, tag = 'internal scratch']
  %s0 = inlined_call_operand.vmem [shape: bf16[16,128], index: 0, kind: input, shape index: {}]
  %s1 = inlined_call_operand.vmem [shape: f32[1,128], index: 1, kind: input, shape index: {}]
  %s2 = inlined_call_operand.vmem [shape: f32[1,128], index: 2, kind: input, shape index: {}]
  %s3 = inlined_call_operand.vmem [shape: bf16[128,128], index: 3, kind: input, shape index: {}]
  %s4 = inlined_call_operand.vmem [shape: f32[1,128], index: 4, kind: input, shape index: {}]
  %s5 = inlined_call_operand.vmem [shape: f32[1,128], index: 5, kind: input, shape index: {}]
  %s6 = inlined_call_operand.vmem [shape: f32[1,128], index: 6, kind: input, shape index: {}]
  %s7 = inlined_call_operand.vmem [shape: bf16[128,128], index: 7, kind: input, shape index: {}]
  %s8 = inlined_call_operand.vmem [shape: f32[1,128], index: 8, kind: input, shape index: {}]
  %s9 = inlined_call_operand.vmem [shape: f32[16,2], index: 9, kind: output, shape index: {}]
  %s10 = sld [smem:[#allocation0]]
  $region46: #{basic_nn_road_segmentation.5} parent=0
    _
  %s12 = ssub.s32 1, %s10
  %s13 = scalar_select 0, %s12, %s10
  // Predicated region
  $region2: #{basic_nn_road_segmentation.5} parent=0 // pred_check
    _
  $region3: #{basic_nn_road_segmentation.5} parent=0 // pred_check_branch
    %15 = sbr.rel (0) target = $region5
  $region4: #{basic_nn_road_segmentation.5} parent=0 // pred_region
    _
  $region5: #{basic_nn_road_segmentation.5} parent=0 // pred_fallthru
    _
  // Predicated region
  $region6: #{basic_nn_road_segmentation.5} parent=0 // pred_check
    _
  $region7: #{basic_nn_road_segmentation.5} parent=0 // pred_check_branch
    %17 = sbr.rel (0) target = $region9
  $region8: #{basic_nn_road_segmentation.5} parent=0 // pred_region
    _
  $region9: #{basic_nn_road_segmentation.5} parent=0 // pred_fallthru
    _
  // Predicated region
  $region10: #{basic_nn_road_segmentation.5} parent=0 // pred_check
    _
  $region11: #{basic_nn_road_segmentation.5} parent=0 // pred_check_branch
    %19 = sbr.rel (0) target = $region13
  $region12: #{basic_nn_road_segmentation.5} parent=0 // pred_region
    _
  $region13: #{basic_nn_road_segmentation.5} parent=0 // pred_fallthru
    _
  // Predicated region
  $region14: #{basic_nn_road_segmentation.5} parent=0 // pred_check
    _
  $region15: #{basic_nn_road_segmentation.5} parent=0 // pred_check_branch
    %21 = sbr.rel (0) target = $region17
  $region16: #{basic_nn_road_segmentation.5} parent=0 // pred_region
    _
  $region17: #{basic_nn_road_segmentation.5} parent=0 // pred_fallthru
    _
  // Predicated region
  $region18: #{basic_nn_road_segmentation.5} parent=0 // pred_check
    _
  $region19: #{basic_nn_road_segmentation.5} parent=0 // pred_check_branch
    %23 = sbr.rel (0) target = $region21
  $region20: #{basic_nn_road_segmentation.5} parent=0 // pred_region
    _
  $region21: #{basic_nn_road_segmentation.5} parent=0 // pred_fallthru
    _
  // Predicated region
  $region22: #{basic_nn_road_segmentation.5} parent=0 // pred_check
    _
  $region23: #{basic_nn_road_segmentation.5} parent=0 // pred_check_branch
    %25 = sbr.rel (0) target = $region25
  $region24: #{basic_nn_road_segmentation.5} parent=0 // pred_region
    _
  $region25: #{basic_nn_road_segmentation.5} parent=0 // pred_fallthru
    _
  // Predicated region
  $region26: #{basic_nn_road_segmentation.5} parent=0 // pred_check
    _
  $region27: #{basic_nn_road_segmentation.5} parent=0 // pred_check_branch
    %27 = sbr.rel (0) target = $region29
  $region28: #{basic_nn_road_segmentation.5} parent=0 // pred_region
    _
  $region29: #{basic_nn_road_segmentation.5} parent=0 // pred_fallthru
    _
  // Predicated region
  $region30: #{basic_nn_road_segmentation.5} parent=0 // pred_check
    _
  $region31: #{basic_nn_road_segmentation.5} parent=0 // pred_check_branch
    %29 = sbr.rel (0) target = $region33
  $region32: #{basic_nn_road_segmentation.5} parent=0 // pred_region
    _
  $region33: #{basic_nn_road_segmentation.5} parent=0 // pred_fallthru
    _
  // Predicated region
  $region34: #{basic_nn_road_segmentation.5} parent=0 // pred_check
    _
  $region35: #{basic_nn_road_segmentation.5} parent=0 // pred_check_branch
    %31 = sbr.rel (0) target = $region37
  $region36: #{basic_nn_road_segmentation.5} parent=0 // pred_region
    _
  $region37: #{basic_nn_road_segmentation.5} parent=0 // pred_fallthru
    _
  %v33 = vld [vmem:[%s0] sm:$0xf]
  %v34 = vld [vmem:[%s0 + $0x4] sm:$0xf]
  %v35 = vunpack.c.l.bf16 %v33
  %v36 = vunpack.c.l.bf16 %v34
  %v37 = vld [vmem:[%s1] sm:$0x1]
  %v39 = vlaneseq
  %v40 = vshrl.u32 %v39, 7
  %v41 = vsub.s32 0, %v40
  %v42 = vrot.slane %v37, %v41
  %v44 = vmul.f32 %v35, %v42
  %v45 = vmul.f32 %v36, %v42
  %v46 = vld [vmem:[%s2] sm:$0x1]
  %v48 = vlaneseq
  %v49 = vshrl.u32 %v48, 7
  %v50 = vsub.s32 0, %v49
  %v51 = vrot.slane %v46, %v50
  %v53 = vadd.f32 %v44, %v51
  %v54 = vadd.f32 %v45, %v51
  %v55 = vmax.f32 %v53, 0.0
  %v56 = vmax.f32 %v54, 0.0
  %v57 = vpack.c.bf16 %v56, %v55
  %v58 = vld [vmem:[%s3] sm:$0xf]
  %v59 = vld [vmem:[%s3 + $0x4] sm:$0xf]
  %v60 = vld [vmem:[%s3 + $0x8] sm:$0xf]
  %v61 = vld [vmem:[%s3 + $0xc] sm:$0xf]
  %v62 = vld [vmem:[%s3 + $0x10] sm:$0xf]
  %v63 = vld [vmem:[%s3 + $0x14] sm:$0xf]
  %v64 = vld [vmem:[%s3 + $0x18] sm:$0xf]
  %v65 = vld [vmem:[%s3 + $0x1c] sm:$0xf]
  %v66 = vld [vmem:[%s3 + $0x20] sm:$0xf]
  %v67 = vld [vmem:[%s3 + $0x24] sm:$0xf]
  %v68 = vld [vmem:[%s3 + $0x28] sm:$0xf]
  %v69 = vld [vmem:[%s3 + $0x2c] sm:$0xf]
  %v70 = vld [vmem:[%s3 + $0x30] sm:$0xf]
  %v71 = vld [vmem:[%s3 + $0x34] sm:$0xf]
  %v72 = vld [vmem:[%s3 + $0x38] sm:$0xf]
  %v73 = vld [vmem:[%s3 + $0x3c] sm:$0xf]
  %v74 = vld [vmem:[%s4] sm:$0x1]
  %v76 = vlaneseq
  %v77 = vshrl.u32 %v76, 7
  %v78 = vsub.s32 0, %v77
  %v79 = vrot.slane %v74, %v78
  %v97 = vunpack.c.l.b16 %v58
  %v98 = vunpack.c.l.b16 %v59
  %v99 = vunpack.c.l.b16 %v60
  %v100 = vunpack.c.l.b16 %v61
  %v101 = vunpack.c.l.b16 %v62
  %v102 = vunpack.c.l.b16 %v63
  %v103 = vunpack.c.l.b16 %v64
  %v104 = vunpack.c.l.b16 %v65
  %v105 = vunpack.c.l.b16 %v66
  %v106 = vunpack.c.l.b16 %v67
  %v107 = vunpack.c.l.b16 %v68
  %v108 = vunpack.c.l.b16 %v69
  %v109 = vunpack.c.l.b16 %v70
  %v110 = vunpack.c.l.b16 %v71
  %v111 = vunpack.c.l.b16 %v72
  %v112 = vunpack.c.l.b16 %v73
  %v113 = vpack.c.b16 %v98, %v97
  %v114 = vpack.c.b16 %v100, %v99
  %v115 = vpack.c.b16 %v102, %v101
  %v116 = vpack.c.b16 %v104, %v103
  %v117 = vpack.c.b16 %v106, %v105
  %v118 = vpack.c.b16 %v108, %v107
  %v119 = vpack.c.b16 %v110, %v109
  %v120 = vpack.c.b16 %v112, %v111
  %129 = vmatprep.subr.bf16.mxu0 0
  %130 = vmatpush1.bf16.msra.mxu0 %v120
  %131 = vmatprep.subr.bf16.mxu0 0
  %132 = vmatpush1.bf16.msra.mxu0 %v119
  %133 = vmatprep.subr.bf16.mxu0 0
  %134 = vmatpush1.bf16.msra.mxu0 %v118
  %135 = vmatprep.subr.bf16.mxu0 0
  %136 = vmatpush1.bf16.msra.mxu0 %v117
  %137 = vmatprep.subr.bf16.mxu0 0
  %138 = vmatpush1.bf16.msra.mxu0 %v116
  %139 = vmatprep.subr.bf16.mxu0 0
  %140 = vmatpush1.bf16.msra.mxu0 %v115
  %141 = vmatprep.subr.bf16.mxu0 0
  %142 = vmatpush1.bf16.msra.mxu0 %v114
  %143 = vmatprep.subr.bf16.mxu0 0
  %144 = vmatpush1.bf16.msra.mxu0 %v113
  %145 = vmatprep.subr.bf16.mxu0 0
  %146 = vmatpush2.bf16.msra.mxu0 0
  %147 = vmatprep.subr.bf16.mxu0 0
  %148 = vmatpush2.bf16.msra.mxu0 0
  %149 = vmatprep.subr.bf16.mxu0 0
  %150 = vmatpush2.bf16.msra.mxu0 0
  %151 = vmatprep.subr.bf16.mxu0 0
  %152 = vmatpush2.bf16.msra.mxu0 0
  %153 = vmatprep.subr.bf16.mxu0 0
  %154 = vmatpush2.bf16.msra.mxu0 0
  %155 = vmatprep.subr.bf16.mxu0 0
  %156 = vmatpush2.bf16.msra.mxu0 0
  %157 = vmatprep.subr.bf16.mxu0 0
  %158 = vmatpush2.bf16.msra.mxu0 0
  %159 = vmatprep.subr.bf16.mxu0 0
  %160 = vmatpush2.bf16.msra.mxu0 0
  %161 = vmatprep.mubr.bf16.mxu0 0
  %162 = vmatmul.mubr.bf16.gmra.mxu0 %v57
  %v163 = vpop.f32.mrf.mxu0
  %v164 = vadd.f32 %v79, %v163
  %v165 = vpop.f32.mrf.mxu0
  %v166 = vpop.f32.mrf.mxu0
  %v167 = vadd.f32 %v79, %v166
  %v168 = vpop.f32.mrf.mxu0
  %169 = vdwg.mxu0
  %v170 = vld [vmem:[%s5] sm:$0x1]
  %v172 = vlaneseq
  %v173 = vshrl.u32 %v172, 7
  %v174 = vsub.s32 0, %v173
  %v175 = vrot.slane %v170, %v174
  %v177 = vmul.f32 %v164, %v175
  %v178 = vmul.f32 %v167, %v175
  %v179 = vld [vmem:[%s6] sm:$0x1]
  %v181 = vlaneseq
  %v182 = vshrl.u32 %v181, 7
  %v183 = vsub.s32 0, %v182
  %v184 = vrot.slane %v179, %v183
  %v186 = vadd.f32 %v177, %v184
  %v187 = vadd.f32 %v178, %v184
  %v188 = vmax.f32 %v186, 0.0
  %v189 = vmax.f32 %v187, 0.0
  %v190 = vpack.c.bf16 %v189, %v188
  %v191 = vld [vmem:[%s7] sm:$0xf]
  %v192 = vld [vmem:[%s7 + $0x4] sm:$0xf]
  %v193 = vld [vmem:[%s7 + $0x8] sm:$0xf]
  %v194 = vld [vmem:[%s7 + $0xc] sm:$0xf]
  %v195 = vld [vmem:[%s7 + $0x10] sm:$0xf]
  %v196 = vld [vmem:[%s7 + $0x14] sm:$0xf]
  %v197 = vld [vmem:[%s7 + $0x18] sm:$0xf]
  %v198 = vld [vmem:[%s7 + $0x1c] sm:$0xf]
  %v199 = vld [vmem:[%s7 + $0x20] sm:$0xf]
  %v200 = vld [vmem:[%s7 + $0x24] sm:$0xf]
  %v201 = vld [vmem:[%s7 + $0x28] sm:$0xf]
  %v202 = vld [vmem:[%s7 + $0x2c] sm:$0xf]
  %v203 = vld [vmem:[%s7 + $0x30] sm:$0xf]
  %v204 = vld [vmem:[%s7 + $0x34] sm:$0xf]
  %v205 = vld [vmem:[%s7 + $0x38] sm:$0xf]
  %v206 = vld [vmem:[%s7 + $0x3c] sm:$0xf]
  %v207 = vld [vmem:[%s8] sm:$0x1]
  %v209 = vlaneseq
  %v210 = vshrl.u32 %v209, 7
  %v211 = vsub.s32 0, %v210
  %v212 = vrot.slane %v207, %v211
  %v230 = vunpack.c.l.b16 %v191
  %v231 = vunpack.c.l.b16 %v192
  %v232 = vunpack.c.l.b16 %v193
  %v233 = vunpack.c.l.b16 %v194
  %v234 = vunpack.c.l.b16 %v195
  %v235 = vunpack.c.l.b16 %v196
  %v236 = vunpack.c.l.b16 %v197
  %v237 = vunpack.c.l.b16 %v198
  %v238 = vunpack.c.l.b16 %v199
  %v239 = vunpack.c.l.b16 %v200
  %v240 = vunpack.c.l.b16 %v201
  %v241 = vunpack.c.l.b16 %v202
  %v242 = vunpack.c.l.b16 %v203
  %v243 = vunpack.c.l.b16 %v204
  %v244 = vunpack.c.l.b16 %v205
  %v245 = vunpack.c.l.b16 %v206
  %v246 = vpack.c.b16 %v231, %v230
  %v247 = vpack.c.b16 %v233, %v232
  %v248 = vpack.c.b16 %v235, %v234
  %v249 = vpack.c.b16 %v237, %v236
  %v250 = vpack.c.b16 %v239, %v238
  %v251 = vpack.c.b16 %v241, %v240
  %v252 = vpack.c.b16 %v243, %v242
  %v253 = vpack.c.b16 %v245, %v244
  %262 = vmatprep.subr.bf16.mxu0 0
  %263 = vmatpush1.bf16.msra.mxu0 %v253
  %264 = vmatprep.subr.bf16.mxu0 0
  %265 = vmatpush1.bf16.msra.mxu0 %v252
  %266 = vmatprep.subr.bf16.mxu0 0
  %267 = vmatpush1.bf16.msra.mxu0 %v251
  %268 = vmatprep.subr.bf16.mxu0 0
  %269 = vmatpush1.bf16.msra.mxu0 %v250
  %270 = vmatprep.subr.bf16.mxu0 0
  %271 = vmatpush1.bf16.msra.mxu0 %v249
  %272 = vmatprep.subr.bf16.mxu0 0
  %273 = vmatpush1.bf16.msra.mxu0 %v248
  %274 = vmatprep.subr.bf16.mxu0 0
  %275 = vmatpush1.bf16.msra.mxu0 %v247
  %276 = vmatprep.subr.bf16.mxu0 0
  %277 = vmatpush1.bf16.msra.mxu0 %v246
  %278 = vmatprep.subr.bf16.mxu0 0
  %279 = vmatpush2.bf16.msra.mxu0 0
  %280 = vmatprep.subr.bf16.mxu0 0
  %281 = vmatpush2.bf16.msra.mxu0 0
  %282 = vmatprep.subr.bf16.mxu0 0
  %283 = vmatpush2.bf16.msra.mxu0 0
  %284 = vmatprep.subr.bf16.mxu0 0
  %285 = vmatpush2.bf16.msra.mxu0 0
  %286 = vmatprep.subr.bf16.mxu0 0
  %287 = vmatpush2.bf16.msra.mxu0 0
  %288 = vmatprep.subr.bf16.mxu0 0
  %289 = vmatpush2.bf16.msra.mxu0 0
  %290 = vmatprep.subr.bf16.mxu0 0
  %291 = vmatpush2.bf16.msra.mxu0 0
  %292 = vmatprep.subr.bf16.mxu0 0
  %293 = vmatpush2.bf16.msra.mxu0 0
  %294 = vmatprep.mubr.bf16.mxu0 0
  %295 = vmatmul.mubr.bf16.gmra.mxu0 %v190
  %v296 = vpop.f32.mrf.mxu0
  %v297 = vadd.f32 %v212, %v296
  %v298 = vpop.f32.mrf.mxu0
  %v299 = vpop.f32.mrf.mxu0
  %v300 = vadd.f32 %v212, %v299
  %v301 = vpop.f32.mrf.mxu0
  %302 = vdwg.mxu0
  %vm303 = vcmask 15360
  %304 = vst.msk [vmem:[%s9] sm:$0xff] %vm303, %v297
  %305 = vst.msk [vmem:[%s9 + $0x8] sm:$0xff] %vm303, %v300
  // Predicated region
  $region38: #{basic_nn_road_segmentation.5} parent=0 // pred_check
    _
  $region39: #{basic_nn_road_segmentation.5} parent=0 // pred_check_branch
    %307 = sbr.rel (0) target = $region41
  $region40: #{basic_nn_road_segmentation.5} parent=0 // pred_region
    _
  $region41: #{basic_nn_road_segmentation.5} parent=0 // pred_fallthru
    _
  // Predicated region
  $region42: #{basic_nn_road_segmentation.5} parent=0 // pred_check
    _
  $region43: #{basic_nn_road_segmentation.5} parent=0 // pred_check_branch
    %309 = sbr.rel (0) target = $region45
  $region44: #{basic_nn_road_segmentation.5} parent=0 // pred_region
    _
  $region45: #{basic_nn_road_segmentation.5} parent=0 // pred_fallthru
    _

</llo_original>
